<compile_context>
chip_gen: v7x
topology: tpu7x:2x2x1
jax: 0.10.0
libtpu: 0.0.40
codegen_flags: <defaults>
</compile_context>

<pallas_src>
import functools

import jax
import jax.numpy as jnp
from jax import lax
from jax.experimental import pallas as pl
from jax.experimental.pallas import tpu as pltpu

L2_REGULARIZER_LAMBDA = 50.0


def _round_up(x, m):
    return ((x + m - 1) // m) * m


def _r2d2_kernel(scale_ref, sxf_ref, qxf_ref, y1hot_ref, logits_ref, *, mm_dtype):
    s = sxf_ref.shape[1]

    # --- adaptive_avg_pool2d(., 1): mean over the minor (spatial) axis.
    #     dtype=f32 accumulates in f32 without an explicit full-block upcast. ---
    support = jnp.mean(sxf_ref[...], axis=-1, dtype=jnp.float32)   # (tb, s, c)
    query = jnp.mean(qxf_ref[...], axis=-1, dtype=jnp.float32)     # (tb, q, c)

    # MXU-native operand dtype (bf16 when the backbone emits bf16), f32 accumulate.
    support_mm = support.astype(mm_dtype)
    query_mm = query.astype(mm_dtype)

    # --- Gram matrix + ridge regularizer: A = S S^T + lambda I ---
    gram = jnp.einsum('tsc,tzc->tsz', support_mm, support_mm,
                      preferred_element_type=jnp.float32)           # (tb, s, s)
    A = gram + L2_REGULARIZER_LAMBDA * jnp.eye(s, dtype=jnp.float32)

    # --- solve A X = Y_onehot via unpivoted Gauss-Jordan (A is SPD + 50 I). ---
    X = y1hot_ref[...].astype(jnp.float32)                          # (tb, s, n_way)
    row_iota = lax.broadcasted_iota(jnp.int32, (1, s, 1), 1)
    for k in range(s):                      # s = n_way * k_shot, static & small
        inv_p = 1.0 / A[:, k:k + 1, k:k + 1]     # exact reciprocal (pivot)
        row_a = A[:, k:k + 1, :] * inv_p         # (tb, 1, s)
        row_x = X[:, k:k + 1, :] * inv_p         # (tb, 1, n_way)
        # factor = col - delta_k: rows != k are eliminated, row k becomes the
        # normalized pivot row in the same update (no where write-backs).
        factor = A[:, :, k:k + 1] - (row_iota == k).astype(jnp.float32)
        A = A - factor * row_a
        X = X - factor * row_x

    # --- ridge_sol = S^T A^{-1} Y  -> (tb, c, n_way) ---
    ridge = jnp.einsum('tsc,tsn->tcn', support_mm, X.astype(mm_dtype),
                       preferred_element_type=jnp.float32)

    # --- logits = scale * Q ridge_sol ---
    logits = jnp.einsum('tqc,tcn->tqn', query_mm, ridge.astype(mm_dtype),
                        preferred_element_type=jnp.float32)
    logits_ref[...] = (scale_ref[0, 0] * logits).astype(logits_ref.dtype)


def _vmem_per_task_bytes(s, q, c, hw, n_way, itemsize):
    """Padded VMEM bytes per task: double-buffered pipelined blocks + f32 temps."""
    lane, f32 = 128, 4
    sub = {4: 8, 2: 16, 1: 32}.get(itemsize, 8)      # sublane tile by dtype width
    hw_p = _round_up(hw, lane)
    # Pipelined blocks (each double-buffered by BlockSpec).
    feat = (s + q) * _round_up(c, sub) * hw_p * itemsize
    y_blk = _round_up(s, 8) * _round_up(n_way, lane) * f32
    o_blk = _round_up(q, 8) * _round_up(n_way, lane) * f32
    io = 2 * (feat + y_blk + o_blk)
    # In-kernel f32 intermediates.
    pool_tmp = (s + q) * _round_up(c, 8) * hw_p * f32 if itemsize < 4 else 0
    pooled = 2 * (s + q) * _round_up(c, lane) * f32                  # pooled + mm copies
    solve = 2 * _round_up(s, 8) * (_round_up(s, lane) + _round_up(n_way, lane)) * f32
    ridge = _round_up(c, 8) * _round_up(n_way, lane) * f32
    logits = _round_up(q, 8) * _round_up(n_way, lane) * f32
    return io + pool_tmp + pooled + solve + ridge + logits


def r2d2_forward(support_xf, support_y, query_xf, query_y, n_way, k_shot, scale):
    """Eval-mode R2D2 forward. Returns (logits_flat, rewards)."""
    b, q, c, h, w = query_xf.shape
    s = support_xf.shape[1]
    assert s == n_way * k_shot
    hw = h * w

    feat_dtype = support_xf.dtype
    itemsize = jnp.dtype(feat_dtype).itemsize
    mm_dtype = jnp.bfloat16 if feat_dtype == jnp.bfloat16 else jnp.float32

    # Consume the NCHW layout directly: merging (h, w) -> hw is a free
    # contiguous reshape -> NO standalone HBM transpose pass before the kernel.
    sxf = support_xf.reshape(b, s, c, hw)
    qxf = query_xf.reshape(b, q, c, hw)
    y1hot = jax.nn.one_hot(support_y, n_way, dtype=jnp.float32)      # (b, s, n_way)
    scale_arr = jnp.asarray(scale, jnp.float32).reshape(1, 1)

    # --- generation-aware VMEM budget ---
    try:
        vmem_cap = int(pltpu.get_tpu_info().vmem_capacity_bytes)
    except Exception:
        vmem_cap = 64 << 20                       # conservative: v7x per-core VMEM
    vmem_limit = (40 << 20) if vmem_cap <= (64 << 20) else (96 << 20)
    vmem_limit = min(vmem_limit, max(vmem_cap - (8 << 20), 16 << 20))
    budget = int(0.55 * vmem_limit)               # headroom for compiler scratch

    per_task = _vmem_per_task_bytes(s, q, c, hw, n_way, itemsize)
    tb_vmem = max(1, budget // max(per_task, 1))
    tb_grid = max(1, b // 4)                      # keep grid >= 2 (ideally >= 4)
    tb = max(1, min(tb_vmem, tb_grid, b))

    b_pad = _round_up(b, tb)
    if b_pad != b:
        pad = b_pad - b
        sxf = jnp.pad(sxf, ((0, pad), (0, 0), (0, 0), (0, 0)))
        qxf = jnp.pad(qxf, ((0, pad), (0, 0), (0, 0), (0, 0)))
        y1hot = jnp.pad(y1hot, ((0, pad), (0, 0), (0, 0)))

    kernel = functools.partial(_r2d2_kernel, mm_dtype=mm_dtype)

    logits = pl.pallas_call(
        kernel,
        out_shape=jax.ShapeDtypeStruct((b_pad, q, n_way), jnp.float32),
        grid=(b_pad // tb,),
        in_specs=[
            pl.BlockSpec(memory_space=pltpu.MemorySpace.SMEM),         # scale scalar
            pl.BlockSpec((tb, s, c, hw), lambda i: (i, 0, 0, 0)),      # support feats
            pl.BlockSpec((tb, q, c, hw), lambda i: (i, 0, 0, 0)),      # query feats
            pl.BlockSpec((tb, s, n_way), lambda i: (i, 0, 0)),         # one-hot labels
        ],
        out_specs=pl.BlockSpec((tb, q, n_way), lambda i: (i, 0, 0)),
        compiler_params=pltpu.CompilerParams(
            dimension_semantics=("parallel",),     # independent tasks -> both TCs
            vmem_limit_bytes=int(vmem_limit)),
    )(scale_arr, sxf, qxf, y1hot)

    logits_flat = logits[:b].reshape(-1, n_way)
    query_y_flat = query_y.reshape(-1)
    predict = jnp.argmax(logits_flat, axis=1)
    rewards = (predict == query_y_flat).astype(jnp.int32)
    return logits_flat, rewards


def r2d2_reference(support_xf, support_y, query_xf, query_y, n_way, k_shot, scale):
    """Pure-JAX reference mirroring the PyTorch forward (eval path)."""
    b, q, c, h, w = query_xf.shape
    s = support_xf.shape[1]
    support = jnp.mean(support_xf.reshape(b, s, c, h * w).astype(jnp.float32), axis=-1)
    query = jnp.mean(query_xf.reshape(b, q, c, h * w).astype(jnp.float32), axis=-1)
    onehot = jax.nn.one_hot(support_y, n_way, dtype=jnp.float32)
    gram = jnp.einsum('bnd,bmd->bnm', support, support)
    A = gram + L2_REGULARIZER_LAMBDA * jnp.eye(s, dtype=jnp.float32)[None]
    Ainv = jnp.linalg.inv(A)
    ridge = jnp.einsum('bsc,bst,btn->bcn', support, Ainv, onehot)    # (b, c, n_way)
    logits = scale * jnp.einsum('bqc,bcn->bqn', query, ridge)
    return logits.reshape(-1, n_way)


if __name__ == "__main__":
    # TODO(synk): training-mode CrossEntropyLoss branch not implemented; this
    # reproduces the eval branch (logits -> argmax -> rewards).
    key = jax.random.PRNGKey(0)
    b, n_way, k_shot = 2, 5, 1
    s = n_way * k_shot
    q = n_way * 2          # 2 queries per class
    c, h, w = 32, 4, 4

    k1, k2, k3 = jax.random.split(key, 3)
    support_xf = jax.random.normal(k1, (b, s, c, h, w), jnp.float32)
    query_xf = jax.random.normal(k2, (b, q, c, h, w), jnp.float32)
    support_y = jnp.tile(jnp.arange(n_way, dtype=jnp.int32), (b, k_shot))   # (b, s)
    query_y = jax.random.randint(k3, (b, q), 0, n_way, dtype=jnp.int32)
    scale = 1.0   # nn.Parameter init: torch.FloatTensor([1.0])

    logits, rewards = r2d2_forward(support_xf, support_y, query_xf, query_y,
                                   n_way, k_shot, scale)
    logits = jax.block_until_ready(logits)
    rewards = jax.block_until_ready(rewards)

    ref_logits = r2d2_reference(support_xf, support_y, query_xf, query_y,
                                n_way, k_shot, scale)
    assert jnp.allclose(logits, ref_logits, rtol=2e-3, atol=2e-3), (
        "Pallas kernel disagrees with reference")
    print("KERNEL_OK")
</pallas_src>

<mosaic_0001>
module attributes {stable_mosaic.version = 11 : i64} {
  func.func @_r2d2_kernel(%arg0: i32, %arg1: memref<1x1xf32, #tpu.memory_space<smem>>, %arg2: memref<1x5x32x16xf32, #tpu.memory_space<vmem>>, %arg3: memref<1x10x32x16xf32, #tpu.memory_space<vmem>>, %arg4: memref<1x5x5xf32, #tpu.memory_space<vmem>>, %arg5: memref<1x10x5xf32, #tpu.memory_space<vmem>>) attributes {dimension_semantics = [#tpu.dimension_semantics<parallel>], iteration_bounds = array<i64: 2>, scalar_prefetch = 0 : i64, scratch_operands = 0 : i64, tpu.core_type = #tpu.core_type<tc>, window_params = [{transform_indices = @transform_0, window_bounds = array<i64: 1, 1>}, {transform_indices = @transform_1, window_bounds = array<i64: 1, 5, 32, 16>}, {transform_indices = @transform_2, window_bounds = array<i64: 1, 10, 32, 16>}, {transform_indices = @transform_3, window_bounds = array<i64: 1, 5, 5>}, {transform_indices = @transform_4, window_bounds = array<i64: 1, 10, 5>}]} {
    %c0 = arith.constant 0 : index
    %c0_0 = arith.constant 0 : index
    %c0_1 = arith.constant 0 : index
    %c0_2 = arith.constant 0 : index
    %0 = vector.load %arg2[%c0, %c0_0, %c0_1, %c0_2] : memref<1x5x32x16xf32, #tpu.memory_space<vmem>>, vector<1x5x32x16xf32>
    %cst = arith.constant dense<0.000000e+00> : vector<1x5x32xf32>
    %1 = vector.multi_reduction <add>, %0, %cst [3] : vector<1x5x32x16xf32> to vector<1x5x32xf32>
    %cst_3 = arith.constant 1.600000e+01 : f32
    %2 = vector.broadcast %cst_3 : f32 to vector<1x5x32xf32>
    %3 = arith.divf %1, %2 : vector<1x5x32xf32>
    %c0_4 = arith.constant 0 : index
    %c0_5 = arith.constant 0 : index
    %c0_6 = arith.constant 0 : index
    %c0_7 = arith.constant 0 : index
    %4 = vector.load %arg3[%c0_4, %c0_5, %c0_6, %c0_7] : memref<1x10x32x16xf32, #tpu.memory_space<vmem>>, vector<1x10x32x16xf32>
    %cst_8 = arith.constant dense<0.000000e+00> : vector<1x10x32xf32>
    %5 = vector.multi_reduction <add>, %4, %cst_8 [3] : vector<1x10x32x16xf32> to vector<1x10x32xf32>
    %cst_9 = arith.constant 1.600000e+01 : f32
    %6 = vector.broadcast %cst_9 : f32 to vector<1x10x32xf32>
    %7 = arith.divf %5, %6 : vector<1x10x32xf32>
    "tpu.trace_start"() <{level = 10 : i32, message = "tsc,tzc->tsz"}> : () -> ()
    %cst_10 = arith.constant dense<0.000000e+00> : vector<1x5x5xf32>
    %8 = tpu.matmul %3, %3, %cst_10 {dimension_numbers = #tpu.dot_dimension_numbers<[2], [2], [1], [1], [0, 0, 0, 1, 1, 1], [0], [0]>} : vector<1x5x32xf32>, vector<1x5x32xf32>, vector<1x5x5xf32> -> vector<1x5x5xf32>
    "tpu.trace_stop"() : () -> ()
    %9 = tpu.iota {dimensions = array<i32: 0>} : vector<5x5xi32>
    %10 = tpu.iota {dimensions = array<i32: 1>} : vector<5x5xi32>
    %c0_i32 = arith.constant 0 : i32
    %11 = vector.broadcast %c0_i32 : i32 to vector<5x5xi32>
    %12 = arith.addi %9, %11 : vector<5x5xi32>
    %13 = arith.cmpi eq, %12, %10 : vector<5x5xi32>
    %14 = arith.extui %13 : vector<5x5xi1> to vector<5x5xi32>
    %15 = arith.sitofp %14 : vector<5x5xi32> to vector<5x5xf32>
    %cst_11 = arith.constant 5.000000e+01 : f32
    %16 = vector.broadcast %cst_11 : f32 to vector<5x5xf32>
    %17 = arith.mulf %16, %15 : vector<5x5xf32>
    %18 = vector.shape_cast %17 : vector<5x5xf32> to vector<1x5x5xf32>
    %19 = arith.addf %8, %18 : vector<1x5x5xf32>
    %c0_12 = arith.constant 0 : index
    %c0_13 = arith.constant 0 : index
    %c0_14 = arith.constant 0 : index
    %20 = vector.load %arg4[%c0_12, %c0_13, %c0_14] : memref<1x5x5xf32, #tpu.memory_space<vmem>>, vector<1x5x5xf32>
    %21 = tpu.iota {dimensions = array<i32: 1>} : vector<1x5x1xi32>
    %22 = vector.extract_strided_slice %19 {offsets = [0, 0, 0], sizes = [1, 1, 1], strides = [1, 1, 1]} : vector<1x5x5xf32> to vector<1x1x1xf32>
    %cst_15 = arith.constant 1.000000e+00 : f32
    %23 = vector.broadcast %cst_15 : f32 to vector<1x1x1xf32>
    %24 = arith.divf %23, %22 : vector<1x1x1xf32>
    %25 = vector.extract_strided_slice %19 {offsets = [0, 0, 0], sizes = [1, 1, 5], strides = [1, 1, 1]} : vector<1x5x5xf32> to vector<1x1x5xf32>
    %26 = vector.broadcast %24 : vector<1x1x1xf32> to vector<1x1x5xf32>
    %27 = arith.mulf %25, %26 : vector<1x1x5xf32>
    %28 = vector.extract_strided_slice %20 {offsets = [0, 0, 0], sizes = [1, 1, 5], strides = [1, 1, 1]} : vector<1x5x5xf32> to vector<1x1x5xf32>
    %29 = vector.broadcast %24 : vector<1x1x1xf32> to vector<1x1x5xf32>
    %30 = arith.mulf %28, %29 : vector<1x1x5xf32>
    %31 = vector.extract_strided_slice %19 {offsets = [0, 0, 0], sizes = [1, 5, 1], strides = [1, 1, 1]} : vector<1x5x5xf32> to vector<1x5x1xf32>
    %c0_i32_16 = arith.constant 0 : i32
    %32 = vector.broadcast %c0_i32_16 : i32 to vector<1x5x1xi32>
    %33 = arith.cmpi eq, %21, %32 : vector<1x5x1xi32>
    %34 = arith.extui %33 : vector<1x5x1xi1> to vector<1x5x1xi32>
    %35 = arith.sitofp %34 : vector<1x5x1xi32> to vector<1x5x1xf32>
    %36 = arith.subf %31, %35 : vector<1x5x1xf32>
    %37 = vector.broadcast %36 : vector<1x5x1xf32> to vector<1x5x5xf32>
    %38 = vector.broadcast %27 : vector<1x1x5xf32> to vector<1x5x5xf32>
    %39 = arith.mulf %37, %38 : vector<1x5x5xf32>
    %40 = arith.subf %19, %39 : vector<1x5x5xf32>
    %41 = vector.broadcast %36 : vector<1x5x1xf32> to vector<1x5x5xf32>
    %42 = vector.broadcast %30 : vector<1x1x5xf32> to vector<1x5x5xf32>
    %43 = arith.mulf %41, %42 : vector<1x5x5xf32>
    %44 = arith.subf %20, %43 : vector<1x5x5xf32>
    %45 = vector.extract_strided_slice %40 {offsets = [0, 1, 1], sizes = [1, 1, 1], strides = [1, 1, 1]} : vector<1x5x5xf32> to vector<1x1x1xf32>
    %cst_17 = arith.constant 1.000000e+00 : f32
    %46 = vector.broadcast %cst_17 : f32 to vector<1x1x1xf32>
    %47 = arith.divf %46, %45 : vector<1x1x1xf32>
    %48 = vector.extract_strided_slice %40 {offsets = [0, 1, 0], sizes = [1, 1, 5], strides = [1, 1, 1]} : vector<1x5x5xf32> to vector<1x1x5xf32>
    %49 = vector.broadcast %47 : vector<1x1x1xf32> to vector<1x1x5xf32>
    %50 = arith.mulf %48, %49 : vector<1x1x5xf32>
    %51 = vector.extract_strided_slice %44 {offsets = [0, 1, 0], sizes = [1, 1, 5], strides = [1, 1, 1]} : vector<1x5x5xf32> to vector<1x1x5xf32>
    %52 = vector.broadcast %47 : vector<1x1x1xf32> to vector<1x1x5xf32>
    %53 = arith.mulf %51, %52 : vector<1x1x5xf32>
    %54 = vector.extract_strided_slice %40 {offsets = [0, 0, 1], sizes = [1, 5, 1], strides = [1, 1, 1]} : vector<1x5x5xf32> to vector<1x5x1xf32>
    %c1_i32 = arith.constant 1 : i32
    %55 = vector.broadcast %c1_i32 : i32 to vector<1x5x1xi32>
    %56 = arith.cmpi eq, %21, %55 : vector<1x5x1xi32>
    %57 = arith.extui %56 : vector<1x5x1xi1> to vector<1x5x1xi32>
    %58 = arith.sitofp %57 : vector<1x5x1xi32> to vector<1x5x1xf32>
    %59 = arith.subf %54, %58 : vector<1x5x1xf32>
    %60 = vector.broadcast %59 : vector<1x5x1xf32> to vector<1x5x5xf32>
    %61 = vector.broadcast %50 : vector<1x1x5xf32> to vector<1x5x5xf32>
    %62 = arith.mulf %60, %61 : vector<1x5x5xf32>
    %63 = arith.subf %40, %62 : vector<1x5x5xf32>
    %64 = vector.broadcast %59 : vector<1x5x1xf32> to vector<1x5x5xf32>
    %65 = vector.broadcast %53 : vector<1x1x5xf32> to vector<1x5x5xf32>
    %66 = arith.mulf %64, %65 : vector<1x5x5xf32>
    %67 = arith.subf %44, %66 : vector<1x5x5xf32>
    %68 = vector.extract_strided_slice %63 {offsets = [0, 2, 2], sizes = [1, 1, 1], strides = [1, 1, 1]} : vector<1x5x5xf32> to vector<1x1x1xf32>
    %cst_18 = arith.constant 1.000000e+00 : f32
    %69 = vector.broadcast %cst_18 : f32 to vector<1x1x1xf32>
    %70 = arith.divf %69, %68 : vector<1x1x1xf32>
    %71 = vector.extract_strided_slice %63 {offsets = [0, 2, 0], sizes = [1, 1, 5], strides = [1, 1, 1]} : vector<1x5x5xf32> to vector<1x1x5xf32>
    %72 = vector.broadcast %70 : vector<1x1x1xf32> to vector<1x1x5xf32>
    %73 = arith.mulf %71, %72 : vector<1x1x5xf32>
    %74 = vector.extract_strided_slice %67 {offsets = [0, 2, 0], sizes = [1, 1, 5], strides = [1, 1, 1]} : vector<1x5x5xf32> to vector<1x1x5xf32>
    %75 = vector.broadcast %70 : vector<1x1x1xf32> to vector<1x1x5xf32>
    %76 = arith.mulf %74, %75 : vector<1x1x5xf32>
    %77 = vector.extract_strided_slice %63 {offsets = [0, 0, 2], sizes = [1, 5, 1], strides = [1, 1, 1]} : vector<1x5x5xf32> to vector<1x5x1xf32>
    %c2_i32 = arith.constant 2 : i32
    %78 = vector.broadcast %c2_i32 : i32 to vector<1x5x1xi32>
    %79 = arith.cmpi eq, %21, %78 : vector<1x5x1xi32>
    %80 = arith.extui %79 : vector<1x5x1xi1> to vector<1x5x1xi32>
    %81 = arith.sitofp %80 : vector<1x5x1xi32> to vector<1x5x1xf32>
    %82 = arith.subf %77, %81 : vector<1x5x1xf32>
    %83 = vector.broadcast %82 : vector<1x5x1xf32> to vector<1x5x5xf32>
    %84 = vector.broadcast %73 : vector<1x1x5xf32> to vector<1x5x5xf32>
    %85 = arith.mulf %83, %84 : vector<1x5x5xf32>
    %86 = arith.subf %63, %85 : vector<1x5x5xf32>
    %87 = vector.broadcast %82 : vector<1x5x1xf32> to vector<1x5x5xf32>
    %88 = vector.broadcast %76 : vector<1x1x5xf32> to vector<1x5x5xf32>
    %89 = arith.mulf %87, %88 : vector<1x5x5xf32>
    %90 = arith.subf %67, %89 : vector<1x5x5xf32>
    %91 = vector.extract_strided_slice %86 {offsets = [0, 3, 3], sizes = [1, 1, 1], strides = [1, 1, 1]} : vector<1x5x5xf32> to vector<1x1x1xf32>
    %cst_19 = arith.constant 1.000000e+00 : f32
    %92 = vector.broadcast %cst_19 : f32 to vector<1x1x1xf32>
    %93 = arith.divf %92, %91 : vector<1x1x1xf32>
    %94 = vector.extract_strided_slice %86 {offsets = [0, 3, 0], sizes = [1, 1, 5], strides = [1, 1, 1]} : vector<1x5x5xf32> to vector<1x1x5xf32>
    %95 = vector.broadcast %93 : vector<1x1x1xf32> to vector<1x1x5xf32>
    %96 = arith.mulf %94, %95 : vector<1x1x5xf32>
    %97 = vector.extract_strided_slice %90 {offsets = [0, 3, 0], sizes = [1, 1, 5], strides = [1, 1, 1]} : vector<1x5x5xf32> to vector<1x1x5xf32>
    %98 = vector.broadcast %93 : vector<1x1x1xf32> to vector<1x1x5xf32>
    %99 = arith.mulf %97, %98 : vector<1x1x5xf32>
    %100 = vector.extract_strided_slice %86 {offsets = [0, 0, 3], sizes = [1, 5, 1], strides = [1, 1, 1]} : vector<1x5x5xf32> to vector<1x5x1xf32>
    %c3_i32 = arith.constant 3 : i32
    %101 = vector.broadcast %c3_i32 : i32 to vector<1x5x1xi32>
    %102 = arith.cmpi eq, %21, %101 : vector<1x5x1xi32>
    %103 = arith.extui %102 : vector<1x5x1xi1> to vector<1x5x1xi32>
    %104 = arith.sitofp %103 : vector<1x5x1xi32> to vector<1x5x1xf32>
    %105 = arith.subf %100, %104 : vector<1x5x1xf32>
    %106 = vector.broadcast %105 : vector<1x5x1xf32> to vector<1x5x5xf32>
    %107 = vector.broadcast %96 : vector<1x1x5xf32> to vector<1x5x5xf32>
    %108 = arith.mulf %106, %107 : vector<1x5x5xf32>
    %109 = arith.subf %86, %108 : vector<1x5x5xf32>
    %110 = vector.broadcast %105 : vector<1x5x1xf32> to vector<1x5x5xf32>
    %111 = vector.broadcast %99 : vector<1x1x5xf32> to vector<1x5x5xf32>
    %112 = arith.mulf %110, %111 : vector<1x5x5xf32>
    %113 = arith.subf %90, %112 : vector<1x5x5xf32>
    %114 = vector.extract_strided_slice %109 {offsets = [0, 4, 4], sizes = [1, 1, 1], strides = [1, 1, 1]} : vector<1x5x5xf32> to vector<1x1x1xf32>
    %cst_20 = arith.constant 1.000000e+00 : f32
    %115 = vector.broadcast %cst_20 : f32 to vector<1x1x1xf32>
    %116 = arith.divf %115, %114 : vector<1x1x1xf32>
    %117 = vector.extract_strided_slice %113 {offsets = [0, 4, 0], sizes = [1, 1, 5], strides = [1, 1, 1]} : vector<1x5x5xf32> to vector<1x1x5xf32>
    %118 = vector.broadcast %116 : vector<1x1x1xf32> to vector<1x1x5xf32>
    %119 = arith.mulf %117, %118 : vector<1x1x5xf32>
    %120 = vector.extract_strided_slice %109 {offsets = [0, 0, 4], sizes = [1, 5, 1], strides = [1, 1, 1]} : vector<1x5x5xf32> to vector<1x5x1xf32>
    %c4_i32 = arith.constant 4 : i32
    %121 = vector.broadcast %c4_i32 : i32 to vector<1x5x1xi32>
    %122 = arith.cmpi eq, %21, %121 : vector<1x5x1xi32>
    %123 = arith.extui %122 : vector<1x5x1xi1> to vector<1x5x1xi32>
    %124 = arith.sitofp %123 : vector<1x5x1xi32> to vector<1x5x1xf32>
    %125 = arith.subf %120, %124 : vector<1x5x1xf32>
    %126 = vector.broadcast %125 : vector<1x5x1xf32> to vector<1x5x5xf32>
    %127 = vector.broadcast %119 : vector<1x1x5xf32> to vector<1x5x5xf32>
    %128 = arith.mulf %126, %127 : vector<1x5x5xf32>
    %129 = arith.subf %113, %128 : vector<1x5x5xf32>
    "tpu.trace_start"() <{level = 10 : i32, message = "tsc,tsn->tcn"}> : () -> ()
    %cst_21 = arith.constant dense<0.000000e+00> : vector<1x32x5xf32>
    %130 = tpu.matmul %3, %129, %cst_21 {dimension_numbers = #tpu.dot_dimension_numbers<[1], [1], [2], [2], [0, 0, 0, 2, 1, 2], [0], [0]>} : vector<1x5x32xf32>, vector<1x5x5xf32>, vector<1x32x5xf32> -> vector<1x32x5xf32>
    "tpu.trace_stop"() : () -> ()
    "tpu.trace_start"() <{level = 10 : i32, message = "tqc,tcn->tqn"}> : () -> ()
    %cst_22 = arith.constant dense<0.000000e+00> : vector<1x10x5xf32>
    %131 = tpu.matmul %7, %130, %cst_22 {dimension_numbers = #tpu.dot_dimension_numbers<[2], [1], [1], [2], [0, 0, 0, 1, 1, 2], [0], [0]>} : vector<1x10x32xf32>, vector<1x32x5xf32>, vector<1x10x5xf32> -> vector<1x10x5xf32>
    "tpu.trace_stop"() : () -> ()
    %c0_23 = arith.constant 0 : index
    %c0_24 = arith.constant 0 : index
    %132 = memref.load %arg1[%c0_23, %c0_24] : memref<1x1xf32, #tpu.memory_space<smem>>
    %133 = vector.broadcast %132 : f32 to vector<1x10x5xf32>
    %134 = arith.mulf %133, %131 : vector<1x10x5xf32>
    %c0_25 = arith.constant 0 : index
    %c0_26 = arith.constant 0 : index
    %c0_27 = arith.constant 0 : index
    %135 = vector.load %arg5[%c0_25, %c0_26, %c0_27] : memref<1x10x5xf32, #tpu.memory_space<vmem>>, vector<1x10x5xf32>
    tpu.vector_store %arg5[%c0_25, %c0_26, %c0_27], %134 {strides = array<i32>} : memref<1x10x5xf32, #tpu.memory_space<vmem>>, vector<1x10x5xf32>,
    return
  }
  func.func @transform_0(%arg0: i32) -> (i32, i32) {
    %c0_i32 = arith.constant 0 : i32
    %c0_i32_0 = arith.constant 0 : i32
    %c0_i32_1 = arith.constant 0 : i32
    return %c0_i32, %c0_i32_0 : i32, i32
  }
  func.func @transform_1(%arg0: i32) -> (i32, i32, i32, i32) {
    %c0_i32 = arith.constant 0 : i32
    %c0_i32_0 = arith.constant 0 : i32
    %c0_i32_1 = arith.constant 0 : i32
    %c0_i32_2 = arith.constant 0 : i32
    return %arg0, %c0_i32, %c0_i32_0, %c0_i32_1 : i32, i32, i32, i32
  }
  func.func @transform_2(%arg0: i32) -> (i32, i32, i32, i32) {
    %c0_i32 = arith.constant 0 : i32
    %c0_i32_0 = arith.constant 0 : i32
    %c0_i32_1 = arith.constant 0 : i32
    %c0_i32_2 = arith.constant 0 : i32
    return %arg0, %c0_i32, %c0_i32_0, %c0_i32_1 : i32, i32, i32, i32
  }
  func.func @transform_3(%arg0: i32) -> (i32, i32, i32) {
    %c0_i32 = arith.constant 0 : i32
    %c0_i32_0 = arith.constant 0 : i32
    %c0_i32_1 = arith.constant 0 : i32
    return %arg0, %c0_i32, %c0_i32_0 : i32, i32, i32
  }
  func.func @transform_4(%arg0: i32) -> (i32, i32, i32) {
    %c0_i32 = arith.constant 0 : i32
    %c0_i32_0 = arith.constant 0 : i32
    %c0_i32_1 = arith.constant 0 : i32
    return %arg0, %c0_i32, %c0_i32_0 : i32, i32, i32
  }
}

</mosaic_0001>

<llo_original>
// kernel: tpu_custom_call.1
$region0: #{tpu_custom_call.1}
  #allocation0 [shape = 'u32[]', space=smem, size = 0x4, offset = 0x4, fixed_abs, tag = 'smem constant byte address 0x4 - core index']
  #allocation1 [shape = 'u32[144,128]{1,0:T(1,128)}', space=vmem, size = 0x12000, scoped, tag = 'internal scratch']
  #allocation2 [shape = 'f32[1,1]{1,0:T(1,128)S(6)}', space=smem, size = 0x200, scoped, tag = 'scoped memory for tpu_custom_call.1']
  %s0 = inlined_call_operand.<no memory space> [shape: f32[1,1], index: 0, kind: input, shape index: {}]
  %s1 = inlined_call_operand.vmem [shape: f32[2,5,32,16], index: 1, kind: input, shape index: {}]
  %s2 = inlined_call_operand.vmem [shape: f32[2,10,32,16], index: 2, kind: input, shape index: {}]
  %s3 = inlined_call_operand.vmem [shape: f32[2,5,5], index: 3, kind: input, shape index: {}]
  %s4 = inlined_call_operand.vmem [shape: f32[2,10,5], index: 4, kind: output, shape index: {}]
  %s5 = sld [smem:[#allocation0]]
  $region49: #{tpu_custom_call.1} parent=0
    _
  %s7 = ssub.s32 1, %s5
  %s8 = scalar_select 0, %s7, %s5
  %9 = sst [smem:[#allocation2]] %s0
  loop: start=0, step=1, limit=4
  $region2: #{tpu_custom_call.1} parent=0 // loop_pre_header
    _
  $region3: #{tpu_custom_call.1} parent=0 // loop_header
    %s11 = sphi 0, %s15
    %p12 = scmp.ge.s32.totalorder %s11, 4
    %s19 = sphi 0, %s19
    %s21 = sphi 0, %s19
    %s22 = sphi 0, %s21
    %s36 = sphi 0, %s22
    %s42 = sphi 0, %s44
    %s45 = sphi 0, %s42
    %s46 = sphi 0, %s45
    %s62 = sphi 0, %s46
    %s68 = sphi 0, %s70
    %s71 = sphi 0, %s68
    %s72 = sphi 0, %s71
    %s88 = sphi 0, %s72
    %s94 = sphi 0, %s96
    %s97 = sphi 0, %s94
    %s98 = sphi 0, %s97
    %s114 = sphi 0, %s98
    %s120 = sphi 0, %s122
    %s123 = sphi 0, %s120
    %s124 = sphi 0, %s123
    %s140 = sphi 0, %s124
  $region4: #{tpu_custom_call.1} parent=0 // loop_header_branch
    %14 = sbr.rel (%p12) target = $region8
  $region5: #{tpu_custom_call.1} parent=0 // loop_body
    %s16 = ssub.s32 %s11, 1
    %s17 = ssub.s32 %s11, 2
    %s18 = sadd.s32 %s11, 1
    %s20 = sadd.s32 %s19, 1
    %p23 = scmp.eq.s32.totalorder %s11, 1
    %p24 = scmp.ne.s32.totalorder %s19, %s21
    %p25 = scmp.eq.s32.totalorder %s11, 0
    %p26 = por %p24, %p25
    %p27 = scmp.ne.s32.totalorder %s19, %s21
    %p28 = scmp.eq.s32.totalorder %s16, 1
    %p29 = por %p27, %p28
    %p30 = scmp.ne.s32.totalorder %s21, %s22
    %p31 = scmp.eq.s32.totalorder %s16, 0
    %p32 = por %p30, %p31
    %p33 = scmp.ne.s32.totalorder %s21, %s22
    %p34 = scmp.eq.s32.totalorder %s17, 1
    %p35 = por %p33, %p34
    %p37 = scmp.ne.s32.totalorder %s22, %s36
    %p38 = scmp.eq.s32.totalorder %s17, 0
    %p39 = por %p37, %p38
    %s40 = ssub.s32 %s11, %s18
    %p41 = scmp.eq.s32.totalorder %s40, 0
    %s43 = sadd.s32 %s42, 1
    %s44 = scalar_select %p41, %s42, %s43
    %p47 = pneg %p41
    %p48 = scmp.eq.s32.totalorder %s11, 1
    %p49 = por %p47, %p48
    %p50 = scmp.ne.s32.totalorder %s42, %s45
    %p51 = scmp.eq.s32.totalorder %s11, 0
    %p52 = por %p50, %p51
    %p53 = scmp.ne.s32.totalorder %s42, %s45
    %p54 = scmp.eq.s32.totalorder %s16, 1
    %p55 = por %p53, %p54
    %p56 = scmp.ne.s32.totalorder %s45, %s46
    %p57 = scmp.eq.s32.totalorder %s16, 0
    %p58 = por %p56, %p57
    %p59 = scmp.ne.s32.totalorder %s45, %s46
    %p60 = scmp.eq.s32.totalorder %s17, 1
    %p61 = por %p59, %p60
    %p63 = scmp.ne.s32.totalorder %s46, %s62
    %p64 = scmp.eq.s32.totalorder %s17, 0
    %p65 = por %p63, %p64
    %s66 = ssub.s32 %s11, %s18
    %p67 = scmp.eq.s32.totalorder %s66, 0
    %s69 = sadd.s32 %s68, 1
    %s70 = scalar_select %p67, %s68, %s69
    %p73 = pneg %p67
    %p74 = scmp.eq.s32.totalorder %s11, 1
    %p75 = por %p73, %p74
    %p76 = scmp.ne.s32.totalorder %s68, %s71
    %p77 = scmp.eq.s32.totalorder %s11, 0
    %p78 = por %p76, %p77
    %p79 = scmp.ne.s32.totalorder %s68, %s71
    %p80 = scmp.eq.s32.totalorder %s16, 1
    %p81 = por %p79, %p80
    %p82 = scmp.ne.s32.totalorder %s71, %s72
    %p83 = scmp.eq.s32.totalorder %s16, 0
    %p84 = por %p82, %p83
    %p85 = scmp.ne.s32.totalorder %s71, %s72
    %p86 = scmp.eq.s32.totalorder %s17, 1
    %p87 = por %p85, %p86
    %p89 = scmp.ne.s32.totalorder %s72, %s88
    %p90 = scmp.eq.s32.totalorder %s17, 0
    %p91 = por %p89, %p90
    %s92 = ssub.s32 %s11, %s18
    %p93 = scmp.eq.s32.totalorder %s92, 0
    %s95 = sadd.s32 %s94, 1
    %s96 = scalar_select %p93, %s94, %s95
    %p99 = pneg %p93
    %p100 = scmp.eq.s32.totalorder %s11, 1
    %p101 = por %p99, %p100
    %p102 = scmp.ne.s32.totalorder %s94, %s97
    %p103 = scmp.eq.s32.totalorder %s11, 0
    %p104 = por %p102, %p103
    %p105 = scmp.ne.s32.totalorder %s94, %s97
    %p106 = scmp.eq.s32.totalorder %s16, 1
    %p107 = por %p105, %p106
    %p108 = scmp.ne.s32.totalorder %s97, %s98
    %p109 = scmp.eq.s32.totalorder %s16, 0
    %p110 = por %p108, %p109
    %p111 = scmp.ne.s32.totalorder %s97, %s98
    %p112 = scmp.eq.s32.totalorder %s17, 1
    %p113 = por %p111, %p112
    %p115 = scmp.ne.s32.totalorder %s98, %s114
    %p116 = scmp.eq.s32.totalorder %s17, 0
    %p117 = por %p115, %p116
    %s118 = ssub.s32 %s11, %s18
    %p119 = scmp.eq.s32.totalorder %s118, 0
    %s121 = sadd.s32 %s120, 1
    %s122 = scalar_select %p119, %s120, %s121
    %p125 = pneg %p119
    %p126 = scmp.eq.s32.totalorder %s11, 1
    %p127 = por %p125, %p126
    %p128 = scmp.ne.s32.totalorder %s120, %s123
    %p129 = scmp.eq.s32.totalorder %s11, 0
    %p130 = por %p128, %p129
    %p131 = scmp.ne.s32.totalorder %s120, %s123
    %p132 = scmp.eq.s32.totalorder %s16, 1
    %p133 = por %p131, %p132
    %p134 = scmp.ne.s32.totalorder %s123, %s124
    %p135 = scmp.eq.s32.totalorder %s16, 0
    %p136 = por %p134, %p135
    %p137 = scmp.ne.s32.totalorder %s123, %s124
    %p138 = scmp.eq.s32.totalorder %s17, 1
    %p139 = por %p137, %p138
    %p141 = scmp.ne.s32.totalorder %s124, %s140
    %p142 = scmp.eq.s32.totalorder %s17, 0
    %p143 = por %p141, %p142
    %p144 = scmp.le.s32.totalorder 1, %s11
    %p145 = scmp.lt.s32.totalorder %s11, 3
    %p146 = pnand %p144, %p145
    %p147 = pneg %p146
    // Predicated region
    $region9: #{tpu_custom_call.1} parent=5 // pred_check
      _
    $region10: #{tpu_custom_call.1} parent=5 // pred_check_branch
      %149 = sbr.rel (%p146) target = $region12
    $region11: #{tpu_custom_call.1} parent=5 // pred_region
      %s150 = ssub.s32 %s11, 1
      // Predicated region
      $region13: #{tpu_custom_call.1} parent=11 // pred_check
        %p151 = pneg %p32
      $region14: #{tpu_custom_call.1} parent=11 // pred_check_branch
        %153 = sbr.rel (%p151) target = $region16
      $region15: #{tpu_custom_call.1} parent=11 // pred_region
        _
      $region16: #{tpu_custom_call.1} parent=11 // pred_fallthru
        _
    $region12: #{tpu_custom_call.1} parent=5 // pred_fallthru
      _
    %p154 = scmp.lt.s32.totalorder %s11, 2
    // Predicated region
    $region17: #{tpu_custom_call.1} parent=5 // pred_check
      %p155 = pneg %p154
    $region18: #{tpu_custom_call.1} parent=5 // pred_check_branch
      %157 = sbr.rel (%p155) target = $region20
    $region19: #{tpu_custom_call.1} parent=5 // pred_region
      // Predicated region
      $region21: #{tpu_custom_call.1} parent=19 // pred_check
        %p158 = pneg %p52
      $region22: #{tpu_custom_call.1} parent=19 // pred_check_branch
        %160 = sbr.rel (%p158) target = $region24
      $region23: #{tpu_custom_call.1} parent=19 // pred_region
        %p161 = scmp.lt.s32.totalorder %s11, 1
        %s162 = scalar_select %p161, %s11, 1
        %s163 = smul.addr %s162, 20
        %s164 = smul.addr %s163, 8
        %s165 = scalar_lea.vmem %s1, %s164
      $region24: #{tpu_custom_call.1} parent=19 // pred_fallthru
        _
      // Predicated region
      $region25: #{tpu_custom_call.1} parent=19 // pred_check
        %p166 = pneg %p78
      $region26: #{tpu_custom_call.1} parent=19 // pred_check_branch
        %168 = sbr.rel (%p166) target = $region28
      $region27: #{tpu_custom_call.1} parent=19 // pred_region
        %p169 = scmp.lt.s32.totalorder %s11, 1
        %s170 = scalar_select %p169, %s11, 1
        %s171 = smul.addr %s170, 40
        %s172 = smul.addr %s171, 8
        %s173 = scalar_lea.vmem %s2, %s172
      $region28: #{tpu_custom_call.1} parent=19 // pred_fallthru
        _
      // Predicated region
      $region29: #{tpu_custom_call.1} parent=19 // pred_check
        %p174 = pneg %p104
      $region30: #{tpu_custom_call.1} parent=19 // pred_check_branch
        %176 = sbr.rel (%p174) target = $region32
      $region31: #{tpu_custom_call.1} parent=19 // pred_region
        %p177 = scmp.lt.s32.totalorder %s11, 1
        %s178 = scalar_select %p177, %s11, 1
        %s179 = smul.addr %s178, 8
        %s180 = scalar_lea.vmem %s3, %s179
      $region32: #{tpu_custom_call.1} parent=19 // pred_fallthru
        _
    $region20: #{tpu_custom_call.1} parent=5 // pred_fallthru
      _
    %p181 = scmp.le.s32.totalorder 1, %s11
    %p182 = scmp.lt.s32.totalorder %s11, 3
    %p183 = pnand %p181, %p182
    %p184 = pneg %p183
    // Predicated region
    $region33: #{tpu_custom_call.1} parent=5 // pred_check
      _
    $region34: #{tpu_custom_call.1} parent=5 // pred_check_branch
      %186 = sbr.rel (%p183) target = $region36
    $region35: #{tpu_custom_call.1} parent=5 // pred_region
      %s187 = ssub.s32 %s11, 1
      %p188 = pneg %p32
      %p189 = pneg %p29
      %p190 = scmp.lt.s32.totalorder %s16, 1
      %s191 = scalar_select %p190, %s16, 1
      %s192 = smul.addr %s191, 20
      %s193 = smul.addr %s192, 8
      %s194 = scalar_lea.vmem %s1, %s193
      %p195 = pneg %p58
      %p196 = pneg %p55
      %p197 = scmp.lt.s32.totalorder %s16, 1
      %s198 = scalar_select %p197, %s16, 1
      %s199 = smul.addr %s198, 40
      %s200 = smul.addr %s199, 8
      %s201 = scalar_lea.vmem %s2, %s200
      %p202 = pneg %p84
      %p203 = pneg %p81
      %p204 = scmp.lt.s32.totalorder %s16, 1
      %s205 = scalar_select %p204, %s16, 1
      %s206 = smul.addr %s205, 8
      %s207 = scalar_lea.vmem %s3, %s206
      %p208 = pneg %p110
      %p209 = pneg %p107
      %p210 = pneg %p136
      %p211 = pneg %p133
      %p212 = scmp.lt.s32.totalorder %s16, 1
      %s213 = scalar_select %p212, %s16, 1
      %s214 = smul.addr %s213, 2
      %s215 = smul.addr %s214, 8
      %s216 = scalar_lea.vmem %s4, %s215
      %p217 = scmp.lt.s32.totalorder %s16, 1
      %s218 = scalar_select %p217, %s16, 1
      %s219 = smul.addr %s218, 20
      %s220 = smul.addr %s219, 8
      %s221 = scalar_lea.vmem %s1, %s220
      %p222 = scmp.lt.s32.totalorder %s16, 1
      %s223 = scalar_select %p222, %s16, 1
      %s224 = smul.addr %s223, 40
      %s225 = smul.addr %s224, 8
      %s226 = scalar_lea.vmem %s2, %s225
      %p227 = scmp.lt.s32.totalorder %s16, 1
      %s228 = scalar_select %p227, %s16, 1
      %s229 = smul.addr %s228, 8
      %s230 = scalar_lea.vmem %s3, %s229
      %p231 = scmp.lt.s32.totalorder %s16, 1
      %s232 = scalar_select %p231, %s16, 1
      %s233 = smul.addr %s232, 2
      %s234 = smul.addr %s233, 8
      %s235 = scalar_lea.vmem %s4, %s234
      %v236 = vld [vmem:[%s221] sm:$0xff]
      %v237 = vld [vmem:[%s221 + $0x8] sm:$0xff]
      %v238 = vld [vmem:[%s221 + $0x10] sm:$0xff]
      %v239 = vld [vmem:[%s221 + $0x18] sm:$0xff]
      %v240 = vld [vmem:[%s221 + $0x20] sm:$0xff]
      %v241 = vld [vmem:[%s221 + $0x28] sm:$0xff]
      %v242 = vld [vmem:[%s221 + $0x30] sm:$0xff]
      %v243 = vld [vmem:[%s221 + $0x38] sm:$0xff]
      %v244 = vld [vmem:[%s221 + $0x40] sm:$0xff]
      %v245 = vld [vmem:[%s221 + $0x48] sm:$0xff]
      %v246 = vld [vmem:[%s221 + $0x50] sm:$0xff]
      %v247 = vld [vmem:[%s221 + $0x58] sm:$0xff]
      %v248 = vld [vmem:[%s221 + $0x60] sm:$0xff]
      %v249 = vld [vmem:[%s221 + $0x68] sm:$0xff]
      %v250 = vld [vmem:[%s221 + $0x70] sm:$0xff]
      %v251 = vld [vmem:[%s221 + $0x78] sm:$0xff]
      %v252 = vld [vmem:[%s221 + $0x80] sm:$0xff]
      %v253 = vld [vmem:[%s221 + $0x88] sm:$0xff]
      %v254 = vld [vmem:[%s221 + $0x90] sm:$0xff]
      %v255 = vld [vmem:[%s221 + $0x98] sm:$0xff]
      %vm256 = vcmask 130048
      %v257 = vsel %vm256, %v236, 0.0
      %258 = vadd.xlane.f32.xlu0 %v257
      %v259 = vpop.xlane.xlu0 %258
      %v260 = vsel %vm256, %v237, 0.0
      %261 = vadd.xlane.f32.xlu0 %v260
      %v262 = vpop.xlane.xlu0 %261
      %v263 = vsel %vm256, %v238, 0.0
      %264 = vadd.xlane.f32.xlu0 %v263
      %v265 = vpop.xlane.xlu0 %264
      %v266 = vsel %vm256, %v239, 0.0
      %267 = vadd.xlane.f32.xlu0 %v266
      %v268 = vpop.xlane.xlu0 %267
      %v269 = vsel %vm256, %v240, 0.0
      %270 = vadd.xlane.f32.xlu0 %v269
      %v271 = vpop.xlane.xlu0 %270
      %v272 = vsel %vm256, %v241, 0.0
      %273 = vadd.xlane.f32.xlu0 %v272
      %v274 = vpop.xlane.xlu0 %273
      %v275 = vsel %vm256, %v242, 0.0
      %276 = vadd.xlane.f32.xlu0 %v275
      %v277 = vpop.xlane.xlu0 %276
      %v278 = vsel %vm256, %v243, 0.0
      %279 = vadd.xlane.f32.xlu0 %v278
      %v280 = vpop.xlane.xlu0 %279
      %v281 = vsel %vm256, %v244, 0.0
      %282 = vadd.xlane.f32.xlu0 %v281
      %v283 = vpop.xlane.xlu0 %282
      %v284 = vsel %vm256, %v245, 0.0
      %285 = vadd.xlane.f32.xlu0 %v284
      %v286 = vpop.xlane.xlu0 %285
      %v287 = vsel %vm256, %v246, 0.0
      %288 = vadd.xlane.f32.xlu0 %v287
      %v289 = vpop.xlane.xlu0 %288
      %v290 = vsel %vm256, %v247, 0.0
      %291 = vadd.xlane.f32.xlu0 %v290
      %v292 = vpop.xlane.xlu0 %291
      %v293 = vsel %vm256, %v248, 0.0
      %294 = vadd.xlane.f32.xlu0 %v293
      %v295 = vpop.xlane.xlu0 %294
      %v296 = vsel %vm256, %v249, 0.0
      %297 = vadd.xlane.f32.xlu0 %v296
      %v298 = vpop.xlane.xlu0 %297
      %v299 = vsel %vm256, %v250, 0.0
      %300 = vadd.xlane.f32.xlu0 %v299
      %v301 = vpop.xlane.xlu0 %300
      %v302 = vsel %vm256, %v251, 0.0
      %303 = vadd.xlane.f32.xlu0 %v302
      %v304 = vpop.xlane.xlu0 %303
      %v305 = vsel %vm256, %v252, 0.0
      %306 = vadd.xlane.f32.xlu0 %v305
      %v307 = vpop.xlane.xlu0 %306
      %v308 = vsel %vm256, %v253, 0.0
      %309 = vadd.xlane.f32.xlu0 %v308
      %v310 = vpop.xlane.xlu0 %309
      %v311 = vsel %vm256, %v254, 0.0
      %312 = vadd.xlane.f32.xlu0 %v311
      %v313 = vpop.xlane.xlu0 %312
      %v314 = vsel %vm256, %v255, 0.0
      %315 = vadd.xlane.f32.xlu0 %v314
      %v316 = vpop.xlane.xlu0 %315
      %v317 = vrcp.pop 16.0
      %v318 = vmul.f32 %v259, %v317
      %v319 = vmul.f32 %v262, %v317
      %v320 = vmul.f32 %v265, %v317
      %v321 = vmul.f32 %v268, %v317
      %v322 = vmul.f32 %v271, %v317
      %v323 = vmul.f32 %v274, %v317
      %v324 = vmul.f32 %v277, %v317
      %v325 = vmul.f32 %v280, %v317
      %v326 = vmul.f32 %v283, %v317
      %v327 = vmul.f32 %v286, %v317
      %v328 = vmul.f32 %v289, %v317
      %v329 = vmul.f32 %v292, %v317
      %v330 = vmul.f32 %v295, %v317
      %v331 = vmul.f32 %v298, %v317
      %v332 = vmul.f32 %v301, %v317
      %v333 = vmul.f32 %v304, %v317
      %v334 = vmul.f32 %v307, %v317
      %v335 = vmul.f32 %v310, %v317
      %v336 = vmul.f32 %v313, %v317
      %v337 = vmul.f32 %v316, %v317
      %v338 = vld [vmem:[%s226] sm:$0xff]
      %v339 = vld [vmem:[%s226 + $0x8] sm:$0xff]
      %v340 = vld [vmem:[%s226 + $0x10] sm:$0xff]
      %v341 = vld [vmem:[%s226 + $0x18] sm:$0xff]
      %v342 = vld [vmem:[%s226 + $0x20] sm:$0xff]
      %v343 = vld [vmem:[%s226 + $0x28] sm:$0xff]
      %v344 = vld [vmem:[%s226 + $0x30] sm:$0xff]
      %v345 = vld [vmem:[%s226 + $0x38] sm:$0xff]
      %v346 = vld [vmem:[%s226 + $0x40] sm:$0xff]
      %v347 = vld [vmem:[%s226 + $0x48] sm:$0xff]
      %v348 = vld [vmem:[%s226 + $0x50] sm:$0xff]
      %v349 = vld [vmem:[%s226 + $0x58] sm:$0xff]
      %v350 = vld [vmem:[%s226 + $0x60] sm:$0xff]
      %v351 = vld [vmem:[%s226 + $0x68] sm:$0xff]
      %v352 = vld [vmem:[%s226 + $0x70] sm:$0xff]
      %v353 = vld [vmem:[%s226 + $0x78] sm:$0xff]
      %v354 = vld [vmem:[%s226 + $0x80] sm:$0xff]
      %v355 = vld [vmem:[%s226 + $0x88] sm:$0xff]
      %v356 = vld [vmem:[%s226 + $0x90] sm:$0xff]
      %v357 = vld [vmem:[%s226 + $0x98] sm:$0xff]
      %v358 = vld [vmem:[%s226 + $0xa0] sm:$0xff]
      %v359 = vld [vmem:[%s226 + $0xa8] sm:$0xff]
      %v360 = vld [vmem:[%s226 + $0xb0] sm:$0xff]
      %v361 = vld [vmem:[%s226 + $0xb8] sm:$0xff]
      %v362 = vld [vmem:[%s226 + $0xc0] sm:$0xff]
      %v363 = vld [vmem:[%s226 + $0xc8] sm:$0xff]
      %v364 = vld [vmem:[%s226 + $0xd0] sm:$0xff]
      %v365 = vld [vmem:[%s226 + $0xd8] sm:$0xff]
      %v366 = vld [vmem:[%s226 + $0xe0] sm:$0xff]
      %v367 = vld [vmem:[%s226 + $0xe8] sm:$0xff]
      %v368 = vld [vmem:[%s226 + $0xf0] sm:$0xff]
      %v369 = vld [vmem:[%s226 + $0xf8] sm:$0xff]
      %v370 = vld [vmem:[%s226 + $0x100] sm:$0xff]
      %v371 = vld [vmem:[%s226 + $0x108] sm:$0xff]
      %v372 = vld [vmem:[%s226 + $0x110] sm:$0xff]
      %v373 = vld [vmem:[%s226 + $0x118] sm:$0xff]
      %v374 = vld [vmem:[%s226 + $0x120] sm:$0xff]
      %v375 = vld [vmem:[%s226 + $0x128] sm:$0xff]
      %v376 = vld [vmem:[%s226 + $0x130] sm:$0xff]
      %v377 = vld [vmem:[%s226 + $0x138] sm:$0xff]
      %v378 = vsel %vm256, %v338, 0.0
      %379 = vadd.xlane.f32.xlu0 %v378
      %v380 = vpop.xlane.xlu0 %379
      %v381 = vsel %vm256, %v339, 0.0
      %382 = vadd.xlane.f32.xlu0 %v381
      %v383 = vpop.xlane.xlu0 %382
      %v384 = vsel %vm256, %v340, 0.0
      %385 = vadd.xlane.f32.xlu0 %v384
      %v386 = vpop.xlane.xlu0 %385
      %v387 = vsel %vm256, %v341, 0.0
      %388 = vadd.xlane.f32.xlu0 %v387
      %v389 = vpop.xlane.xlu0 %388
      %v390 = vsel %vm256, %v342, 0.0
      %391 = vadd.xlane.f32.xlu0 %v390
      %v392 = vpop.xlane.xlu0 %391
      %v393 = vsel %vm256, %v343, 0.0
      %394 = vadd.xlane.f32.xlu0 %v393
      %v395 = vpop.xlane.xlu0 %394
      %v396 = vsel %vm256, %v344, 0.0
      %397 = vadd.xlane.f32.xlu0 %v396
      %v398 = vpop.xlane.xlu0 %397
      %v399 = vsel %vm256, %v345, 0.0
      %400 = vadd.xlane.f32.xlu0 %v399
      %v401 = vpop.xlane.xlu0 %400
      %v402 = vsel %vm256, %v346, 0.0
      %403 = vadd.xlane.f32.xlu0 %v402
      %v404 = vpop.xlane.xlu0 %403
      %v405 = vsel %vm256, %v347, 0.0
      %406 = vadd.xlane.f32.xlu0 %v405
      %v407 = vpop.xlane.xlu0 %406
      %v408 = vsel %vm256, %v348, 0.0
      %409 = vadd.xlane.f32.xlu0 %v408
      %v410 = vpop.xlane.xlu0 %409
      %v411 = vsel %vm256, %v349, 0.0
      %412 = vadd.xlane.f32.xlu0 %v411
      %v413 = vpop.xlane.xlu0 %412
      %v414 = vsel %vm256, %v350, 0.0
      %415 = vadd.xlane.f32.xlu0 %v414
      %v416 = vpop.xlane.xlu0 %415
      %v417 = vsel %vm256, %v351, 0.0
      %418 = vadd.xlane.f32.xlu0 %v417
      %v419 = vpop.xlane.xlu0 %418
      %v420 = vsel %vm256, %v352, 0.0
      %421 = vadd.xlane.f32.xlu0 %v420
      %v422 = vpop.xlane.xlu0 %421
      %v423 = vsel %vm256, %v353, 0.0
      %424 = vadd.xlane.f32.xlu0 %v423
      %v425 = vpop.xlane.xlu0 %424
      %v426 = vsel %vm256, %v354, 0.0
      %427 = vadd.xlane.f32.xlu0 %v426
      %v428 = vpop.xlane.xlu0 %427
      %v429 = vsel %vm256, %v355, 0.0
      %430 = vadd.xlane.f32.xlu0 %v429
      %v431 = vpop.xlane.xlu0 %430
      %v432 = vsel %vm256, %v356, 0.0
      %433 = vadd.xlane.f32.xlu0 %v432
      %v434 = vpop.xlane.xlu0 %433
      %v435 = vsel %vm256, %v357, 0.0
      %436 = vadd.xlane.f32.xlu0 %v435
      %v437 = vpop.xlane.xlu0 %436
      %v438 = vsel %vm256, %v358, 0.0
      %439 = vadd.xlane.f32.xlu0 %v438
      %v440 = vpop.xlane.xlu0 %439
      %v441 = vsel %vm256, %v359, 0.0
      %442 = vadd.xlane.f32.xlu0 %v441
      %v443 = vpop.xlane.xlu0 %442
      %v444 = vsel %vm256, %v360, 0.0
      %445 = vadd.xlane.f32.xlu0 %v444
      %v446 = vpop.xlane.xlu0 %445
      %v447 = vsel %vm256, %v361, 0.0
      %448 = vadd.xlane.f32.xlu0 %v447
      %v449 = vpop.xlane.xlu0 %448
      %v450 = vsel %vm256, %v362, 0.0
      %451 = vadd.xlane.f32.xlu0 %v450
      %v452 = vpop.xlane.xlu0 %451
      %v453 = vsel %vm256, %v363, 0.0
      %454 = vadd.xlane.f32.xlu0 %v453
      %v455 = vpop.xlane.xlu0 %454
      %v456 = vsel %vm256, %v364, 0.0
      %457 = vadd.xlane.f32.xlu0 %v456
      %v458 = vpop.xlane.xlu0 %457
      %v459 = vsel %vm256, %v365, 0.0
      %460 = vadd.xlane.f32.xlu0 %v459
      %v461 = vpop.xlane.xlu0 %460
      %v462 = vsel %vm256, %v366, 0.0
      %463 = vadd.xlane.f32.xlu0 %v462
      %v464 = vpop.xlane.xlu0 %463
      %v465 = vsel %vm256, %v367, 0.0
      %466 = vadd.xlane.f32.xlu0 %v465
      %v467 = vpop.xlane.xlu0 %466
      %v468 = vsel %vm256, %v368, 0.0
      %469 = vadd.xlane.f32.xlu0 %v468
      %v470 = vpop.xlane.xlu0 %469
      %v471 = vsel %vm256, %v369, 0.0
      %472 = vadd.xlane.f32.xlu0 %v471
      %v473 = vpop.xlane.xlu0 %472
      %v474 = vsel %vm256, %v370, 0.0
      %475 = vadd.xlane.f32.xlu0 %v474
      %v476 = vpop.xlane.xlu0 %475
      %v477 = vsel %vm256, %v371, 0.0
      %478 = vadd.xlane.f32.xlu0 %v477
      %v479 = vpop.xlane.xlu0 %478
      %v480 = vsel %vm256, %v372, 0.0
      %481 = vadd.xlane.f32.xlu0 %v480
      %v482 = vpop.xlane.xlu0 %481
      %v483 = vsel %vm256, %v373, 0.0
      %484 = vadd.xlane.f32.xlu0 %v483
      %v485 = vpop.xlane.xlu0 %484
      %v486 = vsel %vm256, %v374, 0.0
      %487 = vadd.xlane.f32.xlu0 %v486
      %v488 = vpop.xlane.xlu0 %487
      %v489 = vsel %vm256, %v375, 0.0
      %490 = vadd.xlane.f32.xlu0 %v489
      %v491 = vpop.xlane.xlu0 %490
      %v492 = vsel %vm256, %v376, 0.0
      %493 = vadd.xlane.f32.xlu0 %v492
      %v494 = vpop.xlane.xlu0 %493
      %v495 = vsel %vm256, %v377, 0.0
      %496 = vadd.xlane.f32.xlu0 %v495
      %v497 = vpop.xlane.xlu0 %496
      %v498 = vmul.f32 %v380, %v317
      %v499 = vmul.f32 %v383, %v317
      %v500 = vmul.f32 %v386, %v317
      %v501 = vmul.f32 %v389, %v317
      %v502 = vmul.f32 %v392, %v317
      %v503 = vmul.f32 %v395, %v317
      %v504 = vmul.f32 %v398, %v317
      %v505 = vmul.f32 %v401, %v317
      %v506 = vmul.f32 %v404, %v317
      %v507 = vmul.f32 %v407, %v317
      %v508 = vmul.f32 %v410, %v317
      %v509 = vmul.f32 %v413, %v317
      %v510 = vmul.f32 %v416, %v317
      %v511 = vmul.f32 %v419, %v317
      %v512 = vmul.f32 %v422, %v317
      %v513 = vmul.f32 %v425, %v317
      %v514 = vmul.f32 %v428, %v317
      %v515 = vmul.f32 %v431, %v317
      %v516 = vmul.f32 %v434, %v317
      %v517 = vmul.f32 %v437, %v317
      %v518 = vmul.f32 %v440, %v317
      %v519 = vmul.f32 %v443, %v317
      %v520 = vmul.f32 %v446, %v317
      %v521 = vmul.f32 %v449, %v317
      %v522 = vmul.f32 %v452, %v317
      %v523 = vmul.f32 %v455, %v317
      %v524 = vmul.f32 %v458, %v317
      %v525 = vmul.f32 %v461, %v317
      %v526 = vmul.f32 %v464, %v317
      %v527 = vmul.f32 %v467, %v317
      %v528 = vmul.f32 %v470, %v317
      %v529 = vmul.f32 %v473, %v317
      %v530 = vmul.f32 %v476, %v317
      %v531 = vmul.f32 %v479, %v317
      %v532 = vmul.f32 %v482, %v317
      %v533 = vmul.f32 %v485, %v317
      %v534 = vmul.f32 %v488, %v317
      %v535 = vmul.f32 %v491, %v317
      %v536 = vmul.f32 %v494, %v317
      %v537 = vmul.f32 %v497, %v317
      %v538 = vlaneseq
      %v539 = vshrl.u32 %v538, 7
      %v540 = vlaneseq
      %v541 = vand.u32 %v540, 127
      %vm542 = vcmp.eq.s32.totalorder %v539, %v541
      %v543 = vsel %vm542, 1, 0
      %v544 = vcvt.s32.f32 %v543
      %v545 = vmul.f32 %v544, 50.0
      %v566 = vlaneseq
      %v567 = vshrl.u32 %v566, 7
      %v568 = vsub.s32 %v541, %v567
      %v569 = vrot.slane %v318, %v568
      %v570 = vadd.s32 %v541, 4294967288
      %v571 = vlaneseq
      %v572 = vshrl.u32 %v571, 7
      %v573 = vsub.s32 %v570, %v572
      %v574 = vrot.slane %v319, %v573
      %vm575 = vcmask 130112
      %v576 = vsel %vm575, %v574, %v569
      %v577 = vadd.s32 %v541, 4294967280
      %v578 = vlaneseq
      %v579 = vshrl.u32 %v578, 7
      %v580 = vsub.s32 %v577, %v579
      %v581 = vrot.slane %v320, %v580
      %vm582 = vcmask 195712
      %v583 = vsel %vm582, %v581, %v576
      %v584 = vadd.s32 %v541, 4294967272
      %v585 = vlaneseq
      %v586 = vshrl.u32 %v585, 7
      %v587 = vsub.s32 %v584, %v586
      %v588 = vrot.slane %v321, %v587
      %vm589 = vcmask 261312
      %v590 = vsel %vm589, %v588, %v583
      %v591 = vlaneseq
      %v592 = vshrl.u32 %v591, 7
      %v593 = vsub.s32 %v541, %v592
      %v594 = vrot.slane %v322, %v593
      %v595 = vlaneseq
      %v596 = vshrl.u32 %v595, 7
      %v597 = vsub.s32 %v570, %v596
      %v598 = vrot.slane %v323, %v597
      %v599 = vsel %vm575, %v598, %v594
      %v600 = vlaneseq
      %v601 = vshrl.u32 %v600, 7
      %v602 = vsub.s32 %v577, %v601
      %v603 = vrot.slane %v324, %v602
      %v604 = vsel %vm582, %v603, %v599
      %v605 = vlaneseq
      %v606 = vshrl.u32 %v605, 7
      %v607 = vsub.s32 %v584, %v606
      %v608 = vrot.slane %v325, %v607
      %v609 = vsel %vm589, %v608, %v604
      %v610 = vlaneseq
      %v611 = vshrl.u32 %v610, 7
      %v612 = vsub.s32 %v541, %v611
      %v613 = vrot.slane %v326, %v612
      %v614 = vlaneseq
      %v615 = vshrl.u32 %v614, 7
      %v616 = vsub.s32 %v570, %v615
      %v617 = vrot.slane %v327, %v616
      %v618 = vsel %vm575, %v617, %v613
      %v619 = vlaneseq
      %v620 = vshrl.u32 %v619, 7
      %v621 = vsub.s32 %v577, %v620
      %v622 = vrot.slane %v328, %v621
      %v623 = vsel %vm582, %v622, %v618
      %v624 = vlaneseq
      %v625 = vshrl.u32 %v624, 7
      %v626 = vsub.s32 %v584, %v625
      %v627 = vrot.slane %v329, %v626
      %v628 = vsel %vm589, %v627, %v623
      %v629 = vlaneseq
      %v630 = vshrl.u32 %v629, 7
      %v631 = vsub.s32 %v541, %v630
      %v632 = vrot.slane %v330, %v631
      %v633 = vlaneseq
      %v634 = vshrl.u32 %v633, 7
      %v635 = vsub.s32 %v570, %v634
      %v636 = vrot.slane %v331, %v635
      %v637 = vsel %vm575, %v636, %v632
      %v638 = vlaneseq
      %v639 = vshrl.u32 %v638, 7
      %v640 = vsub.s32 %v577, %v639
      %v641 = vrot.slane %v332, %v640
      %v642 = vsel %vm582, %v641, %v637
      %v643 = vlaneseq
      %v644 = vshrl.u32 %v643, 7
      %v645 = vsub.s32 %v584, %v644
      %v646 = vrot.slane %v333, %v645
      %v647 = vsel %vm589, %v646, %v642
      %v648 = vlaneseq
      %v649 = vshrl.u32 %v648, 7
      %v650 = vsub.s32 %v541, %v649
      %v651 = vrot.slane %v334, %v650
      %v652 = vlaneseq
      %v653 = vshrl.u32 %v652, 7
      %v654 = vsub.s32 %v570, %v653
      %v655 = vrot.slane %v335, %v654
      %v656 = vsel %vm575, %v655, %v651
      %v657 = vlaneseq
      %v658 = vshrl.u32 %v657, 7
      %v659 = vsub.s32 %v577, %v658
      %v660 = vrot.slane %v336, %v659
      %v661 = vsel %vm582, %v660, %v656
      %v662 = vlaneseq
      %v663 = vshrl.u32 %v662, 7
      %v664 = vsub.s32 %v584, %v663
      %v665 = vrot.slane %v337, %v664
      %v666 = vsel %vm589, %v665, %v661
      %vm667 = vcmask 1041409
      %v668 = vsel %vm667, %v609, %v590
      %vm669 = vcmask 1042434
      %v670 = vsel %vm669, %v628, %v668
      %vm671 = vcmask 1043459
      %v672 = vsel %vm671, %v647, %v670
      %vm673 = vcmask 1044484
      %v674 = vsel %vm673, %v666, %v672
      %vm675 = vcmask 261120
      %v676 = vsel %vm675, %v674, 0
      %678 = vmatprep.subr.mxu0 0.0
      %679 = vmatpush1.xpose.msra.mxu0 %v676
      %680 = vmatprep.subr.mxu0 0.0
      %681 = vmatpush1.xpose.msra.mxu0 0.0
      %682 = vmatprep.subr.mxu0 0.0
      %683 = vmatpush1.xpose.msra.mxu0 0.0
      %684 = vmatprep.subr.mxu0 0.0
      %685 = vmatpush1.xpose.msra.mxu0 0.0
      %686 = vmatprep.subr.mxu0 0.0
      %687 = vmatpush1.xpose.msra.mxu0 0.0
      %688 = vmatprep.subr.mxu0 0.0
      %689 = vmatpush1.xpose.msra.mxu0 0.0
      %690 = vmatprep.subr.mxu0 0.0
      %691 = vmatpush1.xpose.msra.mxu0 0.0
      %692 = vmatprep.subr.mxu0 0.0
      %693 = vmatpush1.xpose.msra.mxu0 0.0
      %694 = vmatprep.subr.mxu0 0.0
      %695 = vmatpush1.xpose.msra.mxu0 0.0
      %696 = vmatprep.subr.mxu0 0.0
      %697 = vmatpush1.xpose.msra.mxu0 0.0
      %698 = vmatprep.subr.mxu0 0.0
      %699 = vmatpush1.xpose.msra.mxu0 0.0
      %700 = vmatprep.subr.mxu0 0.0
      %701 = vmatpush1.xpose.msra.mxu0 0.0
      %702 = vmatprep.subr.mxu0 0.0
      %703 = vmatpush1.xpose.msra.mxu0 0.0
      %704 = vmatprep.subr.mxu0 0.0
      %705 = vmatpush1.xpose.msra.mxu0 0.0
      %706 = vmatprep.subr.mxu0 0.0
      %707 = vmatpush1.xpose.msra.mxu0 0.0
      %708 = vmatprep.subr.mxu0 0.0
      %709 = vmatpush1.xpose.msra.mxu0 0.0
      %710 = vmatprep.subr.mxu0 0.0
      %711 = vmatpush1.xpose.msra.mxu0 0.0
      %712 = vmatprep.subr.mxu0 0.0
      %713 = vmatpush1.xpose.msra.mxu0 0.0
      %714 = vmatprep.subr.mxu0 0.0
      %715 = vmatpush1.xpose.msra.mxu0 0.0
      %716 = vmatprep.subr.mxu0 0.0
      %717 = vmatpush1.xpose.msra.mxu0 0.0
      %718 = vmatprep.subr.mxu0 0.0
      %719 = vmatpush1.xpose.msra.mxu0 0.0
      %720 = vmatprep.subr.mxu0 0.0
      %721 = vmatpush1.xpose.msra.mxu0 0.0
      %722 = vmatprep.subr.mxu0 0.0
      %723 = vmatpush1.xpose.msra.mxu0 0.0
      %724 = vmatprep.subr.mxu0 0.0
      %725 = vmatpush1.xpose.msra.mxu0 0.0
      %726 = vmatprep.subr.mxu0 0.0
      %727 = vmatpush1.xpose.msra.mxu0 0.0
      %728 = vmatprep.subr.mxu0 0.0
      %729 = vmatpush1.xpose.msra.mxu0 0.0
      %730 = vmatprep.subr.mxu0 0.0
      %731 = vmatpush1.xpose.msra.mxu0 0.0
      %732 = vmatprep.subr.mxu0 0.0
      %733 = vmatpush1.xpose.msra.mxu0 0.0
      %734 = vmatprep.subr.mxu0 0.0
      %735 = vmatpush1.xpose.msra.mxu0 0.0
      %736 = vmatprep.subr.mxu0 0.0
      %737 = vmatpush1.xpose.msra.mxu0 0.0
      %738 = vmatprep.subr.mxu0 0.0
      %739 = vmatpush1.xpose.msra.mxu0 0.0
      %740 = vmatprep.subr.mxu0 0.0
      %741 = vmatpush1.xpose.msra.mxu0 0.0
      %742 = vmatprep.mubr.f32.mxu0 0.0
      %743 = vmatmul.mubr.f32.gmra.mrb[0].mxu0 %v676
      %v744 = vpop.f32.mrb[0].mxu0
      %v745 = vadd.f32 %v545, %v744
      %v746 = vpop.f32.mrb[0].mxu0
      %747 = vdwg.mxu0
      %v748 = vld [vmem:[%s230] sm:$0x1f]
      %v749 = vrcp.pop %v745
      %v750 = vmul.f32 1.0, %v749
      %752 = vset.pattern.permute.xlu0 0
      %753 = vperm.xlu0 %752, %v750
      %v754 = vpop.permute.xlu0 %753
      %v756 = vmul.f32 %v745, %v754
      %v757 = vmul.f32 %v748, %v754
      %vm758 = vcmp.eq.s32.totalorder %v539, 0
      %v759 = vsel %vm758, 1, 0
      %v760 = vcvt.s32.f32 %v759
      %v761 = vsub.f32 %v745, %v760
      %763 = vset.pattern.permute.xlu0 0
      %764 = vperm.xlu0 %763, %v761
      %v765 = vpop.permute.xlu0 %764
      %v767 = vlaneseq
      %v768 = vshrl.u32 %v767, 7
      %v769 = vsub.s32 0, %v768
      %v770 = vrot.slane %v756, %v769
      %v771 = vmul.f32 %v765, %v770
      %v772 = vsub.f32 %v745, %v771
      %v773 = vlaneseq
      %v774 = vshrl.u32 %v773, 7
      %v775 = vsub.s32 0, %v774
      %v776 = vrot.slane %v757, %v775
      %v777 = vmul.f32 %v765, %v776
      %v778 = vsub.f32 %v748, %v777
      %v779 = vrcp.pop %v772
      %v780 = vmul.f32 1.0, %v779
      %782 = vset.pattern.permute.xlu0 1
      %783 = vperm.xlu0 %782, %v780
      %v784 = vpop.permute.xlu0 %783
      %v786 = vmul.f32 %v772, %v784
      %v787 = vmul.f32 %v778, %v784
      %vm788 = vcmp.eq.s32.totalorder %v539, 1
      %v789 = vsel %vm788, 1, 0
      %v790 = vcvt.s32.f32 %v789
      %v791 = vsub.f32 %v772, %v790
      %793 = vset.pattern.permute.xlu0 1
      %794 = vperm.xlu0 %793, %v791
      %v795 = vpop.permute.xlu0 %794
      %v797 = vlaneseq
      %v798 = vshrl.u32 %v797, 7
      %v799 = vsub.s32 1, %v798
      %v800 = vrot.slane %v786, %v799
      %v801 = vmul.f32 %v795, %v800
      %v802 = vsub.f32 %v772, %v801
      %v803 = vlaneseq
      %v804 = vshrl.u32 %v803, 7
      %v805 = vsub.s32 1, %v804
      %v806 = vrot.slane %v787, %v805
      %v807 = vmul.f32 %v795, %v806
      %v808 = vsub.f32 %v778, %v807
      %v809 = vrcp.pop %v802
      %v810 = vmul.f32 1.0, %v809
      %812 = vset.pattern.permute.xlu0 2
      %813 = vperm.xlu0 %812, %v810
      %v814 = vpop.permute.xlu0 %813
      %v816 = vmul.f32 %v802, %v814
      %v817 = vmul.f32 %v808, %v814
      %vm818 = vcmp.eq.s32.totalorder %v539, 2
      %v819 = vsel %vm818, 1, 0
      %v820 = vcvt.s32.f32 %v819
      %v821 = vsub.f32 %v802, %v820
      %823 = vset.pattern.permute.xlu0 2
      %824 = vperm.xlu0 %823, %v821
      %v825 = vpop.permute.xlu0 %824
      %v827 = vlaneseq
      %v828 = vshrl.u32 %v827, 7
      %v829 = vsub.s32 2, %v828
      %v830 = vrot.slane %v816, %v829
      %v831 = vmul.f32 %v825, %v830
      %v832 = vsub.f32 %v802, %v831
      %v833 = vlaneseq
      %v834 = vshrl.u32 %v833, 7
      %v835 = vsub.s32 2, %v834
      %v836 = vrot.slane %v817, %v835
      %v837 = vmul.f32 %v825, %v836
      %v838 = vsub.f32 %v808, %v837
      %v839 = vrcp.pop %v832
      %v840 = vmul.f32 1.0, %v839
      %842 = vset.pattern.permute.xlu0 3
      %843 = vperm.xlu0 %842, %v840
      %v844 = vpop.permute.xlu0 %843
      %v846 = vmul.f32 %v832, %v844
      %v847 = vmul.f32 %v838, %v844
      %vm848 = vcmp.eq.s32.totalorder %v539, 3
      %v849 = vsel %vm848, 1, 0
      %v850 = vcvt.s32.f32 %v849
      %v851 = vsub.f32 %v832, %v850
      %853 = vset.pattern.permute.xlu0 3
      %854 = vperm.xlu0 %853, %v851
      %v855 = vpop.permute.xlu0 %854
      %v857 = vlaneseq
      %v858 = vshrl.u32 %v857, 7
      %v859 = vsub.s32 3, %v858
      %v860 = vrot.slane %v846, %v859
      %v861 = vmul.f32 %v855, %v860
      %v862 = vsub.f32 %v832, %v861
      %v863 = vlaneseq
      %v864 = vshrl.u32 %v863, 7
      %v865 = vsub.s32 3, %v864
      %v866 = vrot.slane %v847, %v865
      %v867 = vmul.f32 %v855, %v866
      %v868 = vsub.f32 %v838, %v867
      %v869 = vrcp.pop %v862
      %v870 = vmul.f32 1.0, %v869
      %872 = vset.pattern.permute.xlu0 4
      %873 = vperm.xlu0 %872, %v870
      %v874 = vpop.permute.xlu0 %873
      %v876 = vmul.f32 %v868, %v874
      %vm877 = vcmp.eq.s32.totalorder %v539, 4
      %v878 = vsel %vm877, 1, 0
      %v879 = vcvt.s32.f32 %v878
      %v880 = vsub.f32 %v862, %v879
      %882 = vset.pattern.permute.xlu0 4
      %883 = vperm.xlu0 %882, %v880
      %v884 = vpop.permute.xlu0 %883
      %v886 = vlaneseq
      %v887 = vshrl.u32 %v886, 7
      %v888 = vsub.s32 4, %v887
      %v889 = vrot.slane %v876, %v888
      %v890 = vmul.f32 %v884, %v889
      %v891 = vsub.f32 %v868, %v890
      %893 = vxpose.xlu0.b32.start [1/16] %v674, 128
      %894 = vxpose.xlu0.b32.cont [2/16] 0.0, 128
      %895 = vxpose.xlu0.b32.cont [3/16] 0.0, 128
      %896 = vxpose.xlu0.b32.cont [4/16] 0.0, 128
      %897 = vxpose.xlu0.b32.cont [5/16] 0.0, 128
      %898 = vxpose.xlu0.b32.cont [6/16] 0.0, 128
      %899 = vxpose.xlu0.b32.cont [7/16] 0.0, 128
      %900 = vxpose.xlu0.b32.cont [8/16] 0.0, 128
      %901 = vxpose.xlu0.b32.cont [9/16] 0.0, 128
      %902 = vxpose.xlu0.b32.cont [10/16] 0.0, 128
      %903 = vxpose.xlu0.b32.cont [11/16] 0.0, 128
      %904 = vxpose.xlu0.b32.cont [12/16] 0.0, 128
      %905 = vxpose.xlu0.b32.cont [13/16] 0.0, 128
      %906 = vxpose.xlu0.b32.cont [14/16] 0.0, 128
      %907 = vxpose.xlu0.b32.cont [15/16] 0.0, 128
      %908 = vxpose.xlu0.b32.end [16/16] 0.0, 128
      %v909 = vpop.trf.xlu0
      %v910 = vpop.trf.xlu0
      %v911 = vpop.trf.xlu0
      %v912 = vpop.trf.xlu0
      %v913 = vpop.trf.xlu0
      %v914 = vpop.trf.xlu0
      %v915 = vpop.trf.xlu0
      %v916 = vpop.trf.xlu0
      %v917 = vpop.trf.xlu0
      %v918 = vpop.trf.xlu0
      %v919 = vpop.trf.xlu0
      %v920 = vpop.trf.xlu0
      %v921 = vpop.trf.xlu0
      %v922 = vpop.trf.xlu0
      %v923 = vpop.trf.xlu0
      %v924 = vpop.trf.xlu0
      %vm925 = vcmask 39936
      %v927 = vsel %vm925, %v909, 0
      %v930 = vsel %vm925, %v910, 0
      %v933 = vsel %vm925, %v911, 0
      %v936 = vsel %vm925, %v912, 0
      %vm938 = vcmask 1044480
      %v940 = vsel %vm938, %v891, 0
      %942 = vmatprep.subr.mxu0 0.0
      %943 = vmatpush1.msra.mxu0 %v940
      %944 = vmatprep.subr.mxu0 0.0
      %945 = vmatpush1.msra.mxu0 0.0
      %946 = vmatprep.subr.mxu0 0.0
      %947 = vmatpush1.msra.mxu0 0.0
      %948 = vmatprep.subr.mxu0 0.0
      %949 = vmatpush1.msra.mxu0 0.0
      %950 = vmatprep.subr.mxu0 0.0
      %951 = vmatpush1.msra.mxu0 0.0
      %952 = vmatprep.subr.mxu0 0.0
      %953 = vmatpush1.msra.mxu0 0.0
      %954 = vmatprep.subr.mxu0 0.0
      %955 = vmatpush1.msra.mxu0 0.0
      %956 = vmatprep.subr.mxu0 0.0
      %957 = vmatpush1.msra.mxu0 0.0
      %958 = vmatprep.subr.mxu0 0.0
      %959 = vmatpush1.msra.mxu0 0.0
      %960 = vmatprep.subr.mxu0 0.0
      %961 = vmatpush1.msra.mxu0 0.0
      %962 = vmatprep.subr.mxu0 0.0
      %963 = vmatpush1.msra.mxu0 0.0
      %964 = vmatprep.subr.mxu0 0.0
      %965 = vmatpush1.msra.mxu0 0.0
      %966 = vmatprep.subr.mxu0 0.0
      %967 = vmatpush1.msra.mxu0 0.0
      %968 = vmatprep.subr.mxu0 0.0
      %969 = vmatpush1.msra.mxu0 0.0
      %970 = vmatprep.subr.mxu0 0.0
      %971 = vmatpush1.msra.mxu0 0.0
      %972 = vmatprep.subr.mxu0 0.0
      %973 = vmatpush1.msra.mxu0 0.0
      %974 = vmatprep.subr.mxu0 0.0
      %975 = vmatpush1.msra.mxu0 0.0
      %976 = vmatprep.subr.mxu0 0.0
      %977 = vmatpush1.msra.mxu0 0.0
      %978 = vmatprep.subr.mxu0 0.0
      %979 = vmatpush1.msra.mxu0 0.0
      %980 = vmatprep.subr.mxu0 0.0
      %981 = vmatpush1.msra.mxu0 0.0
      %982 = vmatprep.subr.mxu0 0.0
      %983 = vmatpush1.msra.mxu0 0.0
      %984 = vmatprep.subr.mxu0 0.0
      %985 = vmatpush1.msra.mxu0 0.0
      %986 = vmatprep.subr.mxu0 0.0
      %987 = vmatpush1.msra.mxu0 0.0
      %988 = vmatprep.subr.mxu0 0.0
      %989 = vmatpush1.msra.mxu0 0.0
      %990 = vmatprep.subr.mxu0 0.0
      %991 = vmatpush1.msra.mxu0 0.0
      %992 = vmatprep.subr.mxu0 0.0
      %993 = vmatpush1.msra.mxu0 0.0
      %994 = vmatprep.subr.mxu0 0.0
      %995 = vmatpush1.msra.mxu0 0.0
      %996 = vmatprep.subr.mxu0 0.0
      %997 = vmatpush1.msra.mxu0 0.0
      %998 = vmatprep.subr.mxu0 0.0
      %999 = vmatpush1.msra.mxu0 0.0
      %1000 = vmatprep.subr.mxu0 0.0
      %1001 = vmatpush1.msra.mxu0 0.0
      %1002 = vmatprep.subr.mxu0 0.0
      %1003 = vmatpush1.msra.mxu0 0.0
      %1004 = vmatprep.subr.mxu0 0.0
      %1005 = vmatpush1.msra.mxu0 0.0
      %1006 = vmatprep.mubr.f32.mxu0 0.0
      %1007 = vmatmul.mubr.f32.gmra.mrb[0].mxu0 %v927
      %v1008 = vpop.f32.mrb[0].mxu0
      %v1009 = vadd.f32 0.0, %v1008
      %v1010 = vpop.f32.mrb[0].mxu0
      %1011 = vmatprep.mubr.f32.mxu0 0.0
      %1012 = vmatmul.mubr.f32.gmra.mrb[0].mxu0 %v930
      %v1013 = vpop.f32.mrb[0].mxu0
      %v1014 = vadd.f32 0.0, %v1013
      %v1015 = vpop.f32.mrb[0].mxu0
      %1016 = vmatprep.mubr.f32.mxu0 0.0
      %1017 = vmatmul.mubr.f32.gmra.mrb[0].mxu0 %v933
      %v1018 = vpop.f32.mrb[0].mxu0
      %v1019 = vadd.f32 0.0, %v1018
      %v1020 = vpop.f32.mrb[0].mxu0
      %1021 = vmatprep.mubr.f32.mxu0 0.0
      %1022 = vmatmul.mubr.f32.gmra.mrb[0].mxu0 %v936
      %v1023 = vpop.f32.mrb[0].mxu0
      %v1024 = vadd.f32 0.0, %v1023
      %v1025 = vpop.f32.mrb[0].mxu0
      %1026 = vdwg.mxu0
      %v1067 = vlaneseq
      %v1068 = vshrl.u32 %v1067, 7
      %v1069 = vsub.s32 %v541, %v1068
      %v1070 = vrot.slane %v498, %v1069
      %v1071 = vlaneseq
      %v1072 = vshrl.u32 %v1071, 7
      %v1073 = vsub.s32 %v570, %v1072
      %v1074 = vrot.slane %v499, %v1073
      %v1075 = vsel %vm575, %v1074, %v1070
      %v1076 = vlaneseq
      %v1077 = vshrl.u32 %v1076, 7
      %v1078 = vsub.s32 %v577, %v1077
      %v1079 = vrot.slane %v500, %v1078
      %v1080 = vsel %vm582, %v1079, %v1075
      %v1081 = vlaneseq
      %v1082 = vshrl.u32 %v1081, 7
      %v1083 = vsub.s32 %v584, %v1082
      %v1084 = vrot.slane %v501, %v1083
      %v1085 = vsel %vm589, %v1084, %v1080
      %v1086 = vlaneseq
      %v1087 = vshrl.u32 %v1086, 7
      %v1088 = vsub.s32 %v541, %v1087
      %v1089 = vrot.slane %v502, %v1088
      %v1090 = vlaneseq
      %v1091 = vshrl.u32 %v1090, 7
      %v1092 = vsub.s32 %v570, %v1091
      %v1093 = vrot.slane %v503, %v1092
      %v1094 = vsel %vm575, %v1093, %v1089
      %v1095 = vlaneseq
      %v1096 = vshrl.u32 %v1095, 7
      %v1097 = vsub.s32 %v577, %v1096
      %v1098 = vrot.slane %v504, %v1097
      %v1099 = vsel %vm582, %v1098, %v1094
      %v1100 = vlaneseq
      %v1101 = vshrl.u32 %v1100, 7
      %v1102 = vsub.s32 %v584, %v1101
      %v1103 = vrot.slane %v505, %v1102
      %v1104 = vsel %vm589, %v1103, %v1099
      %v1105 = vlaneseq
      %v1106 = vshrl.u32 %v1105, 7
      %v1107 = vsub.s32 %v541, %v1106
      %v1108 = vrot.slane %v506, %v1107
      %v1109 = vlaneseq
      %v1110 = vshrl.u32 %v1109, 7
      %v1111 = vsub.s32 %v570, %v1110
      %v1112 = vrot.slane %v507, %v1111
      %v1113 = vsel %vm575, %v1112, %v1108
      %v1114 = vlaneseq
      %v1115 = vshrl.u32 %v1114, 7
      %v1116 = vsub.s32 %v577, %v1115
      %v1117 = vrot.slane %v508, %v1116
      %v1118 = vsel %vm582, %v1117, %v1113
      %v1119 = vlaneseq
      %v1120 = vshrl.u32 %v1119, 7
      %v1121 = vsub.s32 %v584, %v1120
      %v1122 = vrot.slane %v509, %v1121
      %v1123 = vsel %vm589, %v1122, %v1118
      %v1124 = vlaneseq
      %v1125 = vshrl.u32 %v1124, 7
      %v1126 = vsub.s32 %v541, %v1125
      %v1127 = vrot.slane %v510, %v1126
      %v1128 = vlaneseq
      %v1129 = vshrl.u32 %v1128, 7
      %v1130 = vsub.s32 %v570, %v1129
      %v1131 = vrot.slane %v511, %v1130
      %v1132 = vsel %vm575, %v1131, %v1127
      %v1133 = vlaneseq
      %v1134 = vshrl.u32 %v1133, 7
      %v1135 = vsub.s32 %v577, %v1134
      %v1136 = vrot.slane %v512, %v1135
      %v1137 = vsel %vm582, %v1136, %v1132
      %v1138 = vlaneseq
      %v1139 = vshrl.u32 %v1138, 7
      %v1140 = vsub.s32 %v584, %v1139
      %v1141 = vrot.slane %v513, %v1140
      %v1142 = vsel %vm589, %v1141, %v1137
      %v1143 = vlaneseq
      %v1144 = vshrl.u32 %v1143, 7
      %v1145 = vsub.s32 %v541, %v1144
      %v1146 = vrot.slane %v514, %v1145
      %v1147 = vlaneseq
      %v1148 = vshrl.u32 %v1147, 7
      %v1149 = vsub.s32 %v570, %v1148
      %v1150 = vrot.slane %v515, %v1149
      %v1151 = vsel %vm575, %v1150, %v1146
      %v1152 = vlaneseq
      %v1153 = vshrl.u32 %v1152, 7
      %v1154 = vsub.s32 %v577, %v1153
      %v1155 = vrot.slane %v516, %v1154
      %v1156 = vsel %vm582, %v1155, %v1151
      %v1157 = vlaneseq
      %v1158 = vshrl.u32 %v1157, 7
      %v1159 = vsub.s32 %v584, %v1158
      %v1160 = vrot.slane %v517, %v1159
      %v1161 = vsel %vm589, %v1160, %v1156
      %v1162 = vlaneseq
      %v1163 = vshrl.u32 %v1162, 7
      %v1164 = vsub.s32 %v541, %v1163
      %v1165 = vrot.slane %v518, %v1164
      %v1166 = vlaneseq
      %v1167 = vshrl.u32 %v1166, 7
      %v1168 = vsub.s32 %v570, %v1167
      %v1169 = vrot.slane %v519, %v1168
      %v1170 = vsel %vm575, %v1169, %v1165
      %v1171 = vlaneseq
      %v1172 = vshrl.u32 %v1171, 7
      %v1173 = vsub.s32 %v577, %v1172
      %v1174 = vrot.slane %v520, %v1173
      %v1175 = vsel %vm582, %v1174, %v1170
      %v1176 = vlaneseq
      %v1177 = vshrl.u32 %v1176, 7
      %v1178 = vsub.s32 %v584, %v1177
      %v1179 = vrot.slane %v521, %v1178
      %v1180 = vsel %vm589, %v1179, %v1175
      %v1181 = vlaneseq
      %v1182 = vshrl.u32 %v1181, 7
      %v1183 = vsub.s32 %v541, %v1182
      %v1184 = vrot.slane %v522, %v1183
      %v1185 = vlaneseq
      %v1186 = vshrl.u32 %v1185, 7
      %v1187 = vsub.s32 %v570, %v1186
      %v1188 = vrot.slane %v523, %v1187
      %v1189 = vsel %vm575, %v1188, %v1184
      %v1190 = vlaneseq
      %v1191 = vshrl.u32 %v1190, 7
      %v1192 = vsub.s32 %v577, %v1191
      %v1193 = vrot.slane %v524, %v1192
      %v1194 = vsel %vm582, %v1193, %v1189
      %v1195 = vlaneseq
      %v1196 = vshrl.u32 %v1195, 7
      %v1197 = vsub.s32 %v584, %v1196
      %v1198 = vrot.slane %v525, %v1197
      %v1199 = vsel %vm589, %v1198, %v1194
      %v1200 = vlaneseq
      %v1201 = vshrl.u32 %v1200, 7
      %v1202 = vsub.s32 %v541, %v1201
      %v1203 = vrot.slane %v526, %v1202
      %v1204 = vlaneseq
      %v1205 = vshrl.u32 %v1204, 7
      %v1206 = vsub.s32 %v570, %v1205
      %v1207 = vrot.slane %v527, %v1206
      %v1208 = vsel %vm575, %v1207, %v1203
      %v1209 = vlaneseq
      %v1210 = vshrl.u32 %v1209, 7
      %v1211 = vsub.s32 %v577, %v1210
      %v1212 = vrot.slane %v528, %v1211
      %v1213 = vsel %vm582, %v1212, %v1208
      %v1214 = vlaneseq
      %v1215 = vshrl.u32 %v1214, 7
      %v1216 = vsub.s32 %v584, %v1215
      %v1217 = vrot.slane %v529, %v1216
      %v1218 = vsel %vm589, %v1217, %v1213
      %v1219 = vlaneseq
      %v1220 = vshrl.u32 %v1219, 7
      %v1221 = vsub.s32 %v541, %v1220
      %v1222 = vrot.slane %v530, %v1221
      %v1223 = vlaneseq
      %v1224 = vshrl.u32 %v1223, 7
      %v1225 = vsub.s32 %v570, %v1224
      %v1226 = vrot.slane %v531, %v1225
      %v1227 = vsel %vm575, %v1226, %v1222
      %v1228 = vlaneseq
      %v1229 = vshrl.u32 %v1228, 7
      %v1230 = vsub.s32 %v577, %v1229
      %v1231 = vrot.slane %v532, %v1230
      %v1232 = vsel %vm582, %v1231, %v1227
      %v1233 = vlaneseq
      %v1234 = vshrl.u32 %v1233, 7
      %v1235 = vsub.s32 %v584, %v1234
      %v1236 = vrot.slane %v533, %v1235
      %v1237 = vsel %vm589, %v1236, %v1232
      %v1238 = vlaneseq
      %v1239 = vshrl.u32 %v1238, 7
      %v1240 = vsub.s32 %v541, %v1239
      %v1241 = vrot.slane %v534, %v1240
      %v1242 = vlaneseq
      %v1243 = vshrl.u32 %v1242, 7
      %v1244 = vsub.s32 %v570, %v1243
      %v1245 = vrot.slane %v535, %v1244
      %v1246 = vsel %vm575, %v1245, %v1241
      %v1247 = vlaneseq
      %v1248 = vshrl.u32 %v1247, 7
      %v1249 = vsub.s32 %v577, %v1248
      %v1250 = vrot.slane %v536, %v1249
      %v1251 = vsel %vm582, %v1250, %v1246
      %v1252 = vlaneseq
      %v1253 = vshrl.u32 %v1252, 7
      %v1254 = vsub.s32 %v584, %v1253
      %v1255 = vrot.slane %v537, %v1254
      %v1256 = vsel %vm589, %v1255, %v1251
      %v1257 = vsel %vm667, %v1104, %v1085
      %v1258 = vsel %vm669, %v1123, %v1257
      %v1259 = vsel %vm671, %v1142, %v1258
      %v1260 = vsel %vm673, %v1161, %v1259
      %vm1261 = vcmask 1045509
      %v1262 = vsel %vm1261, %v1180, %v1260
      %vm1263 = vcmask 1046534
      %v1264 = vsel %vm1263, %v1199, %v1262
      %vm1265 = vcmask 1047559
      %v1266 = vsel %vm1265, %v1218, %v1264
      %v1267 = vsel %vm667, %v1256, %v1237
      %v1268 = vsel %vm675, %v1266, 0
      %v1270 = vsel %vm675, %v1267, 0
      %1272 = vmatprep.subr.mxu0 0.0
      %1273 = vmatpush1.msra.mxu0 %v1009
      %1274 = vmatprep.subr.mxu0 0.0
      %1275 = vmatpush1.msra.mxu0 %v1014
      %1276 = vmatprep.subr.mxu0 0.0
      %1277 = vmatpush1.msra.mxu0 %v1019
      %1278 = vmatprep.subr.mxu0 0.0
      %1279 = vmatpush1.msra.mxu0 %v1024
      %1280 = vmatprep.subr.mxu0 0.0
      %1281 = vmatpush1.msra.mxu0 0.0
      %1282 = vmatprep.subr.mxu0 0.0
      %1283 = vmatpush1.msra.mxu0 0.0
      %1284 = vmatprep.subr.mxu0 0.0
      %1285 = vmatpush1.msra.mxu0 0.0
      %1286 = vmatprep.subr.mxu0 0.0
      %1287 = vmatpush1.msra.mxu0 0.0
      %1288 = vmatprep.subr.mxu0 0.0
      %1289 = vmatpush1.msra.mxu0 0.0
      %1290 = vmatprep.subr.mxu0 0.0
      %1291 = vmatpush1.msra.mxu0 0.0
      %1292 = vmatprep.subr.mxu0 0.0
      %1293 = vmatpush1.msra.mxu0 0.0
      %1294 = vmatprep.subr.mxu0 0.0
      %1295 = vmatpush1.msra.mxu0 0.0
      %1296 = vmatprep.subr.mxu0 0.0
      %1297 = vmatpush1.msra.mxu0 0.0
      %1298 = vmatprep.subr.mxu0 0.0
      %1299 = vmatpush1.msra.mxu0 0.0
      %1300 = vmatprep.subr.mxu0 0.0
      %1301 = vmatpush1.msra.mxu0 0.0
      %1302 = vmatprep.subr.mxu0 0.0
      %1303 = vmatpush1.msra.mxu0 0.0
      %1304 = vmatprep.subr.mxu0 0.0
      %1305 = vmatpush1.msra.mxu0 0.0
      %1306 = vmatprep.subr.mxu0 0.0
      %1307 = vmatpush1.msra.mxu0 0.0
      %1308 = vmatprep.subr.mxu0 0.0
      %1309 = vmatpush1.msra.mxu0 0.0
      %1310 = vmatprep.subr.mxu0 0.0
      %1311 = vmatpush1.msra.mxu0 0.0
      %1312 = vmatprep.subr.mxu0 0.0
      %1313 = vmatpush1.msra.mxu0 0.0
      %1314 = vmatprep.subr.mxu0 0.0
      %1315 = vmatpush1.msra.mxu0 0.0
      %1316 = vmatprep.subr.mxu0 0.0
      %1317 = vmatpush1.msra.mxu0 0.0
      %1318 = vmatprep.subr.mxu0 0.0
      %1319 = vmatpush1.msra.mxu0 0.0
      %1320 = vmatprep.subr.mxu0 0.0
      %1321 = vmatpush1.msra.mxu0 0.0
      %1322 = vmatprep.subr.mxu0 0.0
      %1323 = vmatpush1.msra.mxu0 0.0
      %1324 = vmatprep.subr.mxu0 0.0
      %1325 = vmatpush1.msra.mxu0 0.0
      %1326 = vmatprep.subr.mxu0 0.0
      %1327 = vmatpush1.msra.mxu0 0.0
      %1328 = vmatprep.subr.mxu0 0.0
      %1329 = vmatpush1.msra.mxu0 0.0
      %1330 = vmatprep.subr.mxu0 0.0
      %1331 = vmatpush1.msra.mxu0 0.0
      %1332 = vmatprep.subr.mxu0 0.0
      %1333 = vmatpush1.msra.mxu0 0.0
      %1334 = vmatprep.subr.mxu0 0.0
      %1335 = vmatpush1.msra.mxu0 0.0
      %1336 = vmatprep.mubr.f32.mxu0 0.0
      %1337 = vmatmul.mubr.f32.gmra.mrb[0].mxu0 %v1268
      %v1338 = vpop.f32.mrb[0].mxu0
      %v1339 = vadd.f32 0.0, %v1338
      %v1340 = vpop.f32.mrb[0].mxu0
      %1341 = vmatprep.mubr.f32.mxu0 0.0
      %1342 = vmatmul.mubr.f32.gmra.mrb[0].mxu0 %v1270
      %v1343 = vpop.f32.mrb[0].mxu0
      %v1344 = vadd.f32 0.0, %v1343
      %v1345 = vpop.f32.mrb[0].mxu0
      %1346 = vdwg.mxu0
      %s1347 = sld [smem:[#allocation2]]
      %v1348 = vstv %s1347
      %v1349 = vmul.f32 %v1348, %v1339
      %v1350 = vmul.f32 %v1348, %v1344
      %1351 = vst.msk [vmem:[%s235] sm:$0xff] %vm925, %v1349
      %vm1352 = vcmask 33792
      %1353 = vst.msk [vmem:[%s235 + $0x8] sm:$0x3] %vm1352, %v1350
      %p1354 = scmp.lt.s32.totalorder %s16, 1
      %s1355 = scalar_select %p1354, %s16, 1
      %s1356 = smul.addr %s1355, 2
      %s1357 = smul.addr %s1356, 8
      %s1358 = scalar_lea.vmem %s4, %s1357
      // Predicated region
      $region37: #{tpu_custom_call.1} parent=35 // pred_check
        %p1359 = pneg %p133
      $region38: #{tpu_custom_call.1} parent=35 // pred_check_branch
        %1361 = sbr.rel (%p1359) target = $region40
      $region39: #{tpu_custom_call.1} parent=35 // pred_region
        _
      $region40: #{tpu_custom_call.1} parent=35 // pred_fallthru
        _
    $region36: #{tpu_custom_call.1} parent=5 // pred_fallthru
      _
    %p1362 = scmp.le.s32.totalorder 2, %s11
    // Predicated region
    $region41: #{tpu_custom_call.1} parent=5 // pred_check
      %p1363 = pneg %p1362
    $region42: #{tpu_custom_call.1} parent=5 // pred_check_branch
      %1365 = sbr.rel (%p1363) target = $region44
    $region43: #{tpu_custom_call.1} parent=5 // pred_region
      %s1366 = ssub.s32 %s11, 2
      // Predicated region
      $region45: #{tpu_custom_call.1} parent=43 // pred_check
        %p1367 = pneg %p139
      $region46: #{tpu_custom_call.1} parent=43 // pred_check_branch
        %1369 = sbr.rel (%p1367) target = $region48
      $region47: #{tpu_custom_call.1} parent=43 // pred_region
        %p1370 = scmp.lt.s32.totalorder %s17, 1
        %s1371 = scalar_select %p1370, %s17, 1
        %s1372 = smul.addr %s1371, 2
        %s1373 = smul.addr %s1372, 8
        %s1374 = scalar_lea.vmem %s4, %s1373
      $region48: #{tpu_custom_call.1} parent=43 // pred_fallthru
        _
    $region44: #{tpu_custom_call.1} parent=5 // pred_fallthru
      _
  $region6: #{tpu_custom_call.1} parent=0 // loop_footer
    %s15 = sadd.s32 1, %s11
  $region7: #{tpu_custom_call.1} parent=0 // loop_footer_branch
    %10 = sbr.rel target = $region3
  $region8: #{tpu_custom_call.1} parent=0 // loop_exit
    _

</llo_original>
